<compile_context>
chip_gen: v5e
topology: v5e:2x2
jax: 0.10.0
libtpu: 0.0.40
codegen_flags: <defaults>
</compile_context>

<pallas_src>
import functools

import numpy as np
import jax
import jax.numpy as jnp
from jax import lax
from jax.experimental import pallas as pl
from jax.experimental.pallas import tpu as pltpu


def bigru_kernel(x_ref, wih_ref, bih_ref, whh_ref, bhn_ref, out_ref, gi_ref,
                 *, T, Bp, H, out_row):
    # ---- One-time phase: lane-dense input projection per direction.
    # gi_ref[d] holds x_t @ [W_ir|W_iz|W_in] + folded bias for all T*Bp rows.
    x2 = x_ref[...]                                              # (T*Bp, H)
    gi_ref[0] = (jnp.dot(x2, wih_ref[0], preferred_element_type=jnp.float32)
                 + bih_ref[0])
    gi_ref[1] = (jnp.dot(x2, wih_ref[1], preferred_element_type=jnp.float32)
                 + bih_ref[1])

    # Recurrent weights stay resident across the time loop.
    whh_f = whh_ref[0]                                           # (H, 3H)
    whh_b = whh_ref[1]
    bn_f = bhn_ref[0]                                            # (1, 3H): [0|0|b_hn]
    bn_b = bhn_ref[1]

    def cell(h, gi, whh, bn):
        # Single fused (Bp,H)@(H,3H) matmul on the serial chain, one bias add
        # (zero in the r/z lanes), one full-tile sigmoid (n lanes discarded).
        gh = jnp.dot(h, whh, preferred_element_type=jnp.float32) + bn   # (Bp,3H)
        s = jax.nn.sigmoid(gi + gh)                                      # r/z lanes valid
        r = s[:, 0:H]
        z = s[:, H:2 * H]
        n = jnp.tanh(gi[:, 2 * H:3 * H] + r * gh[:, 2 * H:3 * H])
        return n + z * (h - n)                                           # == (1-z)*n + z*h

    h_f = jnp.zeros((Bp, H), jnp.float32)
    h_b = jnp.zeros((Bp, H), jnp.float32)

    if T <= 16:
        # Fully static unroll: LLO scheduler sees across iterations and the
        # two independent direction chains interleave; all slice starts are
        # compile-time constants (sublane-aligned, Bp multiple of 8).
        for t in range(T):
            f0 = t * Bp                 # forward reads time t
            b0 = (T - 1 - t) * Bp       # backward reads time T-1-t
            h_f = cell(h_f, gi_ref[0, f0:f0 + Bp, :], whh_f, bn_f)
            h_b = cell(h_b, gi_ref[1, b0:b0 + Bp, :], whh_b, bn_b)
    else:
        # Long sequences: bound live ranges / code size; unroll=2 still lets
        # the scheduler interleave the two direction chains.
        def body(t, carry):
            hf, hb = carry
            f0 = pl.multiple_of(t * Bp, 8)
            b0 = pl.multiple_of((T - 1 - t) * Bp, 8)
            hf = cell(hf, gi_ref[0, pl.ds(f0, Bp), :], whh_f, bn_f)
            hb = cell(hb, gi_ref[1, pl.ds(b0, Bp), :], whh_b, bn_b)
            return hf, hb
        h_f, h_b = lax.fori_loop(0, T, body, (h_f, h_b), unroll=2)

    # Downstream only consumes hidden[0, -1, :] and hidden[1, -1, :]
    # (last *original* batch row of each direction's final state).
    out_ref[0:1, :] = h_f[out_row:out_row + 1, :]
    out_ref[1:2, :] = h_b[out_row:out_row + 1, :]


def pack_params(params, H):
    """One-time prepare step: pack weights/biases into the kernel layout.

    Stored torch-like format (already transposed to (H, 3H), gate order r,z,n):
      wih_*, whh_*: (H, 3H);  bih_*, bhh_*: (1, 3H).
    Kernel layout:
      wih, whh: (2, H, 3H) [dir 0 = forward, dir 1 = backward]
      bih: (2, 1, 3H) with b_ih + b_hh folded for r/z, b_ih only for n
      bhn: (2, 1, 3H) zero in r/z lanes, b_hn in the n lanes
    """
    def fold(bih, bhh):
        return bih + jnp.concatenate(
            [bhh[:, :2 * H], jnp.zeros((1, H), bhh.dtype)], axis=1)

    def nrow(bhh):
        return jnp.concatenate(
            [jnp.zeros((1, 2 * H), bhh.dtype), bhh[:, 2 * H:]], axis=1)

    return {
        "wih": jnp.stack([params["wih_f"], params["wih_b"]]),       # (2, H, 3H)
        "whh": jnp.stack([params["whh_f"], params["whh_b"]]),       # (2, H, 3H)
        "bih": jnp.stack([fold(params["bih_f"], params["bhh_f"]),
                          fold(params["bih_b"], params["bhh_b"])]),  # (2, 1, 3H)
        "bhn": jnp.stack([nrow(params["bhh_f"]),
                          nrow(params["bhh_b"])]),                   # (2, 1, 3H)
    }


def bigru_forward(x, packed):
    """x: (T, B, H) float32, packed = pack_params(...).  Returns (2*H,)."""
    T, B, H = x.shape
    Bp = ((B + 7) // 8) * 8          # pad batch to the f32 sublane count (8)

    x_p = jnp.pad(x, ((0, 0), (0, Bp - B), (0, 0)))
    x2 = x_p.reshape(T * Bp, H)      # row t*Bp + b  <->  x[t, b]

    # Explicit VMEM budget (lane/sublane padded), with headroom; capped at the
    # smallest physical VMEM across v5e/v6e/v7x (64 MiB on v7x).
    def rup(a, b):
        return (a + b - 1) // b * b
    lane3h = rup(3 * H, 128)
    laneh = rup(H, 128)
    gi_bytes = 2 * T * Bp * lane3h * 4
    x_bytes = T * Bp * laneh * 4
    w_bytes = 2 * 2 * rup(H, 8) * lane3h * 4
    misc_bytes = 2 * 2 * 8 * lane3h * 4 + 8 * laneh * 4
    vmem_limit = int(min(64 << 20,
                         2 * (gi_bytes + x_bytes + w_bytes + misc_bytes) + (8 << 20)))

    kernel = functools.partial(bigru_kernel, T=T, Bp=Bp, H=H, out_row=B - 1)
    hidden_last = pl.pallas_call(
        kernel,
        out_shape=jax.ShapeDtypeStruct((2, H), jnp.float32),
        in_specs=[pl.BlockSpec(memory_space=pltpu.MemorySpace.VMEM)] * 5,
        out_specs=pl.BlockSpec(memory_space=pltpu.MemorySpace.VMEM),
        scratch_shapes=[pltpu.VMEM((2, T * Bp, 3 * H), jnp.float32)],
        compiler_params=pltpu.CompilerParams(vmem_limit_bytes=vmem_limit),
    )(x2, packed["wih"], packed["bih"], packed["whh"], packed["bhn"])

    # torch.cat((flatten(hidden[0, -1, :]), flatten(hidden[1, -1, :])))
    return hidden_last.reshape(-1)


def init_params(key, H):
    # PyTorch nn.GRU default init: U(-1/sqrt(H), 1/sqrt(H)).
    bound = 1.0 / np.sqrt(H)
    keys = jax.random.split(key, 8)

    def u(k, shape):
        return jax.random.uniform(k, shape, jnp.float32, -bound, bound)

    # PyTorch stores weight_ih_l0 as (3H, H); we keep the transposed (H, 3H).
    return {
        "wih_f": u(keys[0], (3 * H, H)).T,
        "whh_f": u(keys[1], (3 * H, H)).T,
        "bih_f": u(keys[2], (1, 3 * H)),
        "bhh_f": u(keys[3], (1, 3 * H)),
        "wih_b": u(keys[4], (3 * H, H)).T,
        "whh_b": u(keys[5], (3 * H, H)).T,
        "bih_b": u(keys[6], (1, 3 * H)),
        "bhh_b": u(keys[7], (1, 3 * H)),
    }


def bigru_reference(x, params):
    """Pure-JAX reference (same math as PyTorch nn.GRU, no Pallas)."""
    T, B, H = x.shape

    def cell(x_t, h_prev, wih, whh, bih, bhh):
        gi = x_t @ wih + bih
        gh = h_prev @ whh + bhh
        i_r, i_z, i_n = gi[:, 0:H], gi[:, H:2 * H], gi[:, 2 * H:3 * H]
        h_r, h_z, h_n = gh[:, 0:H], gh[:, H:2 * H], gh[:, 2 * H:3 * H]
        r = jax.nn.sigmoid(i_r + h_r)
        z = jax.nn.sigmoid(i_z + h_z)
        n = jnp.tanh(i_n + r * h_n)
        return (1.0 - z) * n + z * h_prev

    h0 = jnp.zeros((B, H), jnp.float32)

    def fscan(h, x_t):
        return cell(x_t, h, params["wih_f"], params["whh_f"],
                    params["bih_f"], params["bhh_f"]), None

    def bscan(h, x_t):
        return cell(x_t, h, params["wih_b"], params["whh_b"],
                    params["bih_b"], params["bhh_b"]), None

    h_fwd, _ = lax.scan(fscan, h0, x)
    h_bwd, _ = lax.scan(bscan, h0, x[::-1])
    return jnp.concatenate([h_fwd[-1], h_bwd[-1]], axis=0)


if __name__ == "__main__":
    T, B, H = 8, 4, 32  # seq_len, batch, hidden_size

    key = jax.random.PRNGKey(0)
    k_x, k_p = jax.random.split(key)
    x = jax.random.normal(k_x, (T, B, H), jnp.float32)
    params = init_params(k_p, H)

    # One-time prepare step (off the per-call hot path).
    packed = pack_params(params, H)
    packed = jax.tree_util.tree_map(jax.block_until_ready, packed)

    fwd = jax.jit(bigru_forward)
    out = jax.block_until_ready(fwd(x, packed))

    ref = jax.block_until_ready(bigru_reference(x, params))
    np.testing.assert_allclose(np.asarray(out), np.asarray(ref),
                               rtol=1e-4, atol=1e-5)
    assert out.shape == (2 * H,)
    print("KERNEL_OK")
</pallas_src>

<mosaic_0001>
module attributes {stable_mosaic.version = 11 : i64} {
  func.func @bigru_kernel(%arg0: memref<64x32xf32, #tpu.memory_space<vmem>>, %arg1: memref<2x32x96xf32, #tpu.memory_space<vmem>>, %arg2: memref<2x1x96xf32, #tpu.memory_space<vmem>>, %arg3: memref<2x32x96xf32, #tpu.memory_space<vmem>>, %arg4: memref<2x1x96xf32, #tpu.memory_space<vmem>>, %arg5: memref<2x32xf32, #tpu.memory_space<vmem>>, %arg6: memref<2x64x96xf32, #tpu.memory_space<vmem>>) attributes {dimension_semantics = [], scalar_prefetch = 0 : i64, scratch_operands = 1 : i64, tpu.core_type = #tpu.core_type<tc>} {
    %c0 = arith.constant 0 : index
    %c0_0 = arith.constant 0 : index
    %0 = vector.load %arg0[%c0, %c0_0] : memref<64x32xf32, #tpu.memory_space<vmem>>, vector<64x32xf32>
    %c0_1 = arith.constant 0 : index
    %c0_2 = arith.constant 0 : index
    %c0_3 = arith.constant 0 : index
    %1 = vector.load %arg1[%c0_1, %c0_2, %c0_3] : memref<2x32x96xf32, #tpu.memory_space<vmem>>, vector<1x32x96xf32>
    %2 = vector.shape_cast %1 : vector<1x32x96xf32> to vector<32x96xf32>
    %cst = arith.constant dense<0.000000e+00> : vector<64x96xf32>
    %3 = tpu.matmul %0, %2, %cst {dimension_numbers = #tpu.dot_dimension_numbers<[1], [0], [0], [1], [0, 0, 1, 1], [], []>} : vector<64x32xf32>, vector<32x96xf32>, vector<64x96xf32> -> vector<64x96xf32>
    %c0_4 = arith.constant 0 : index
    %c0_5 = arith.constant 0 : index
    %c0_6 = arith.constant 0 : index
    %4 = vector.load %arg2[%c0_4, %c0_5, %c0_6] : memref<2x1x96xf32, #tpu.memory_space<vmem>>, vector<1x1x96xf32>
    %5 = vector.shape_cast %4 : vector<1x1x96xf32> to vector<1x96xf32>
    %6 = vector.broadcast %5 : vector<1x96xf32> to vector<64x96xf32>
    %7 = arith.addf %3, %6 : vector<64x96xf32>
    %c0_7 = arith.constant 0 : index
    %c0_8 = arith.constant 0 : index
    %c0_9 = arith.constant 0 : index
    %8 = vector.load %arg6[%c0_7, %c0_8, %c0_9] : memref<2x64x96xf32, #tpu.memory_space<vmem>>, vector<1x64x96xf32>
    %9 = vector.shape_cast %8 : vector<1x64x96xf32> to vector<64x96xf32>
    %10 = vector.shape_cast %7 : vector<64x96xf32> to vector<1x64x96xf32>
    tpu.vector_store %arg6[%c0_7, %c0_8, %c0_9], %10 {strides = array<i32>} : memref<2x64x96xf32, #tpu.memory_space<vmem>>, vector<1x64x96xf32>,
    %c1 = arith.constant 1 : index
    %c0_10 = arith.constant 0 : index
    %c0_11 = arith.constant 0 : index
    %11 = vector.load %arg1[%c1, %c0_10, %c0_11] : memref<2x32x96xf32, #tpu.memory_space<vmem>>, vector<1x32x96xf32>
    %12 = vector.shape_cast %11 : vector<1x32x96xf32> to vector<32x96xf32>
    %cst_12 = arith.constant dense<0.000000e+00> : vector<64x96xf32>
    %13 = tpu.matmul %0, %12, %cst_12 {dimension_numbers = #tpu.dot_dimension_numbers<[1], [0], [0], [1], [0, 0, 1, 1], [], []>} : vector<64x32xf32>, vector<32x96xf32>, vector<64x96xf32> -> vector<64x96xf32>
    %c1_13 = arith.constant 1 : index
    %c0_14 = arith.constant 0 : index
    %c0_15 = arith.constant 0 : index
    %14 = vector.load %arg2[%c1_13, %c0_14, %c0_15] : memref<2x1x96xf32, #tpu.memory_space<vmem>>, vector<1x1x96xf32>
    %15 = vector.shape_cast %14 : vector<1x1x96xf32> to vector<1x96xf32>
    %16 = vector.broadcast %15 : vector<1x96xf32> to vector<64x96xf32>
    %17 = arith.addf %13, %16 : vector<64x96xf32>
    %c1_16 = arith.constant 1 : index
    %c0_17 = arith.constant 0 : index
    %c0_18 = arith.constant 0 : index
    %18 = vector.load %arg6[%c1_16, %c0_17, %c0_18] : memref<2x64x96xf32, #tpu.memory_space<vmem>>, vector<1x64x96xf32>
    %19 = vector.shape_cast %18 : vector<1x64x96xf32> to vector<64x96xf32>
    %20 = vector.shape_cast %17 : vector<64x96xf32> to vector<1x64x96xf32>
    tpu.vector_store %arg6[%c1_16, %c0_17, %c0_18], %20 {strides = array<i32>} : memref<2x64x96xf32, #tpu.memory_space<vmem>>, vector<1x64x96xf32>,
    %c0_19 = arith.constant 0 : index
    %c0_20 = arith.constant 0 : index
    %c0_21 = arith.constant 0 : index
    %21 = vector.load %arg3[%c0_19, %c0_20, %c0_21] : memref<2x32x96xf32, #tpu.memory_space<vmem>>, vector<1x32x96xf32>
    %22 = vector.shape_cast %21 : vector<1x32x96xf32> to vector<32x96xf32>
    %c1_22 = arith.constant 1 : index
    %c0_23 = arith.constant 0 : index
    %c0_24 = arith.constant 0 : index
    %23 = vector.load %arg3[%c1_22, %c0_23, %c0_24] : memref<2x32x96xf32, #tpu.memory_space<vmem>>, vector<1x32x96xf32>
    %24 = vector.shape_cast %23 : vector<1x32x96xf32> to vector<32x96xf32>
    %c0_25 = arith.constant 0 : index
    %c0_26 = arith.constant 0 : index
    %c0_27 = arith.constant 0 : index
    %25 = vector.load %arg4[%c0_25, %c0_26, %c0_27] : memref<2x1x96xf32, #tpu.memory_space<vmem>>, vector<1x1x96xf32>
    %26 = vector.shape_cast %25 : vector<1x1x96xf32> to vector<1x96xf32>
    %c1_28 = arith.constant 1 : index
    %c0_29 = arith.constant 0 : index
    %c0_30 = arith.constant 0 : index
    %27 = vector.load %arg4[%c1_28, %c0_29, %c0_30] : memref<2x1x96xf32, #tpu.memory_space<vmem>>, vector<1x1x96xf32>
    %28 = vector.shape_cast %27 : vector<1x1x96xf32> to vector<1x96xf32>
    %cst_31 = arith.constant 0.000000e+00 : f32
    %29 = vector.broadcast %cst_31 : f32 to vector<8x32xf32>
    %cst_32 = arith.constant 0.000000e+00 : f32
    %30 = vector.broadcast %cst_32 : f32 to vector<8x32xf32>
    %c0_33 = arith.constant 0 : index
    %c0_34 = arith.constant 0 : index
    %c0_35 = arith.constant 0 : index
    %31 = vector.load %arg6[%c0_33, %c0_34, %c0_35] : memref<2x64x96xf32, #tpu.memory_space<vmem>>, vector<1x8x96xf32>
    %32 = vector.shape_cast %31 : vector<1x8x96xf32> to vector<8x96xf32>
    %cst_36 = arith.constant dense<0.000000e+00> : vector<8x96xf32>
    %33 = tpu.matmul %29, %22, %cst_36 {dimension_numbers = #tpu.dot_dimension_numbers<[1], [0], [0], [1], [0, 0, 1, 1], [], []>} : vector<8x32xf32>, vector<32x96xf32>, vector<8x96xf32> -> vector<8x96xf32>
    %34 = vector.broadcast %26 : vector<1x96xf32> to vector<8x96xf32>
    %35 = arith.addf %33, %34 : vector<8x96xf32>
    %36 = arith.addf %32, %35 : vector<8x96xf32>
    %37 = arith.negf %36 : vector<8x96xf32>
    %38 = math.exp %37 : vector<8x96xf32>
    %cst_37 = arith.constant 1.000000e+00 : f32
    %39 = vector.broadcast %cst_37 : f32 to vector<8x96xf32>
    %40 = arith.addf %39, %38 : vector<8x96xf32>
    %41 = arith.divf %39, %40 : vector<8x96xf32>
    %42 = vector.extract_strided_slice %41 {offsets = [0, 0], sizes = [8, 32], strides = [1, 1]} : vector<8x96xf32> to vector<8x32xf32>
    %43 = vector.extract_strided_slice %41 {offsets = [0, 32], sizes = [8, 32], strides = [1, 1]} : vector<8x96xf32> to vector<8x32xf32>
    %44 = vector.extract_strided_slice %32 {offsets = [0, 64], sizes = [8, 32], strides = [1, 1]} : vector<8x96xf32> to vector<8x32xf32>
    %45 = vector.extract_strided_slice %35 {offsets = [0, 64], sizes = [8, 32], strides = [1, 1]} : vector<8x96xf32> to vector<8x32xf32>
    %46 = arith.mulf %42, %45 : vector<8x32xf32>
    %47 = arith.addf %44, %46 : vector<8x32xf32>
    %48 = math.tanh %47 : vector<8x32xf32>
    %49 = arith.subf %29, %48 : vector<8x32xf32>
    %50 = arith.mulf %43, %49 : vector<8x32xf32>
    %51 = arith.addf %48, %50 : vector<8x32xf32>
    %c1_38 = arith.constant 1 : index
    %c56 = arith.constant 56 : index
    %c0_39 = arith.constant 0 : index
    %52 = vector.load %arg6[%c1_38, %c56, %c0_39] : memref<2x64x96xf32, #tpu.memory_space<vmem>>, vector<1x8x96xf32>
    %53 = vector.shape_cast %52 : vector<1x8x96xf32> to vector<8x96xf32>
    %cst_40 = arith.constant dense<0.000000e+00> : vector<8x96xf32>
    %54 = tpu.matmul %30, %24, %cst_40 {dimension_numbers = #tpu.dot_dimension_numbers<[1], [0], [0], [1], [0, 0, 1, 1], [], []>} : vector<8x32xf32>, vector<32x96xf32>, vector<8x96xf32> -> vector<8x96xf32>
    %55 = vector.broadcast %28 : vector<1x96xf32> to vector<8x96xf32>
    %56 = arith.addf %54, %55 : vector<8x96xf32>
    %57 = arith.addf %53, %56 : vector<8x96xf32>
    %58 = arith.negf %57 : vector<8x96xf32>
    %59 = math.exp %58 : vector<8x96xf32>
    %cst_41 = arith.constant 1.000000e+00 : f32
    %60 = vector.broadcast %cst_41 : f32 to vector<8x96xf32>
    %61 = arith.addf %60, %59 : vector<8x96xf32>
    %62 = arith.divf %60, %61 : vector<8x96xf32>
    %63 = vector.extract_strided_slice %62 {offsets = [0, 0], sizes = [8, 32], strides = [1, 1]} : vector<8x96xf32> to vector<8x32xf32>
    %64 = vector.extract_strided_slice %62 {offsets = [0, 32], sizes = [8, 32], strides = [1, 1]} : vector<8x96xf32> to vector<8x32xf32>
    %65 = vector.extract_strided_slice %53 {offsets = [0, 64], sizes = [8, 32], strides = [1, 1]} : vector<8x96xf32> to vector<8x32xf32>
    %66 = vector.extract_strided_slice %56 {offsets = [0, 64], sizes = [8, 32], strides = [1, 1]} : vector<8x96xf32> to vector<8x32xf32>
    %67 = arith.mulf %63, %66 : vector<8x32xf32>
    %68 = arith.addf %65, %67 : vector<8x32xf32>
    %69 = math.tanh %68 : vector<8x32xf32>
    %70 = arith.subf %30, %69 : vector<8x32xf32>
    %71 = arith.mulf %64, %70 : vector<8x32xf32>
    %72 = arith.addf %69, %71 : vector<8x32xf32>
    %c0_42 = arith.constant 0 : index
    %c8 = arith.constant 8 : index
    %c0_43 = arith.constant 0 : index
    %73 = vector.load %arg6[%c0_42, %c8, %c0_43] : memref<2x64x96xf32, #tpu.memory_space<vmem>>, vector<1x8x96xf32>
    %74 = vector.shape_cast %73 : vector<1x8x96xf32> to vector<8x96xf32>
    %cst_44 = arith.constant dense<0.000000e+00> : vector<8x96xf32>
    %75 = tpu.matmul %51, %22, %cst_44 {dimension_numbers = #tpu.dot_dimension_numbers<[1], [0], [0], [1], [0, 0, 1, 1], [], []>} : vector<8x32xf32>, vector<32x96xf32>, vector<8x96xf32> -> vector<8x96xf32>
    %76 = vector.broadcast %26 : vector<1x96xf32> to vector<8x96xf32>
    %77 = arith.addf %75, %76 : vector<8x96xf32>
    %78 = arith.addf %74, %77 : vector<8x96xf32>
    %79 = arith.negf %78 : vector<8x96xf32>
    %80 = math.exp %79 : vector<8x96xf32>
    %cst_45 = arith.constant 1.000000e+00 : f32
    %81 = vector.broadcast %cst_45 : f32 to vector<8x96xf32>
    %82 = arith.addf %81, %80 : vector<8x96xf32>
    %83 = arith.divf %81, %82 : vector<8x96xf32>
    %84 = vector.extract_strided_slice %83 {offsets = [0, 0], sizes = [8, 32], strides = [1, 1]} : vector<8x96xf32> to vector<8x32xf32>
    %85 = vector.extract_strided_slice %83 {offsets = [0, 32], sizes = [8, 32], strides = [1, 1]} : vector<8x96xf32> to vector<8x32xf32>
    %86 = vector.extract_strided_slice %74 {offsets = [0, 64], sizes = [8, 32], strides = [1, 1]} : vector<8x96xf32> to vector<8x32xf32>
    %87 = vector.extract_strided_slice %77 {offsets = [0, 64], sizes = [8, 32], strides = [1, 1]} : vector<8x96xf32> to vector<8x32xf32>
    %88 = arith.mulf %84, %87 : vector<8x32xf32>
    %89 = arith.addf %86, %88 : vector<8x32xf32>
    %90 = math.tanh %89 : vector<8x32xf32>
    %91 = arith.subf %51, %90 : vector<8x32xf32>
    %92 = arith.mulf %85, %91 : vector<8x32xf32>
    %93 = arith.addf %90, %92 : vector<8x32xf32>
    %c1_46 = arith.constant 1 : index
    %c48 = arith.constant 48 : index
    %c0_47 = arith.constant 0 : index
    %94 = vector.load %arg6[%c1_46, %c48, %c0_47] : memref<2x64x96xf32, #tpu.memory_space<vmem>>, vector<1x8x96xf32>
    %95 = vector.shape_cast %94 : vector<1x8x96xf32> to vector<8x96xf32>
    %cst_48 = arith.constant dense<0.000000e+00> : vector<8x96xf32>
    %96 = tpu.matmul %72, %24, %cst_48 {dimension_numbers = #tpu.dot_dimension_numbers<[1], [0], [0], [1], [0, 0, 1, 1], [], []>} : vector<8x32xf32>, vector<32x96xf32>, vector<8x96xf32> -> vector<8x96xf32>
    %97 = vector.broadcast %28 : vector<1x96xf32> to vector<8x96xf32>
    %98 = arith.addf %96, %97 : vector<8x96xf32>
    %99 = arith.addf %95, %98 : vector<8x96xf32>
    %100 = arith.negf %99 : vector<8x96xf32>
    %101 = math.exp %100 : vector<8x96xf32>
    %cst_49 = arith.constant 1.000000e+00 : f32
    %102 = vector.broadcast %cst_49 : f32 to vector<8x96xf32>
    %103 = arith.addf %102, %101 : vector<8x96xf32>
    %104 = arith.divf %102, %103 : vector<8x96xf32>
    %105 = vector.extract_strided_slice %104 {offsets = [0, 0], sizes = [8, 32], strides = [1, 1]} : vector<8x96xf32> to vector<8x32xf32>
    %106 = vector.extract_strided_slice %104 {offsets = [0, 32], sizes = [8, 32], strides = [1, 1]} : vector<8x96xf32> to vector<8x32xf32>
    %107 = vector.extract_strided_slice %95 {offsets = [0, 64], sizes = [8, 32], strides = [1, 1]} : vector<8x96xf32> to vector<8x32xf32>
    %108 = vector.extract_strided_slice %98 {offsets = [0, 64], sizes = [8, 32], strides = [1, 1]} : vector<8x96xf32> to vector<8x32xf32>
    %109 = arith.mulf %105, %108 : vector<8x32xf32>
    %110 = arith.addf %107, %109 : vector<8x32xf32>
    %111 = math.tanh %110 : vector<8x32xf32>
    %112 = arith.subf %72, %111 : vector<8x32xf32>
    %113 = arith.mulf %106, %112 : vector<8x32xf32>
    %114 = arith.addf %111, %113 : vector<8x32xf32>
    %c0_50 = arith.constant 0 : index
    %c16 = arith.constant 16 : index
    %c0_51 = arith.constant 0 : index
    %115 = vector.load %arg6[%c0_50, %c16, %c0_51] : memref<2x64x96xf32, #tpu.memory_space<vmem>>, vector<1x8x96xf32>
    %116 = vector.shape_cast %115 : vector<1x8x96xf32> to vector<8x96xf32>
    %cst_52 = arith.constant dense<0.000000e+00> : vector<8x96xf32>
    %117 = tpu.matmul %93, %22, %cst_52 {dimension_numbers = #tpu.dot_dimension_numbers<[1], [0], [0], [1], [0, 0, 1, 1], [], []>} : vector<8x32xf32>, vector<32x96xf32>, vector<8x96xf32> -> vector<8x96xf32>
    %118 = vector.broadcast %26 : vector<1x96xf32> to vector<8x96xf32>
    %119 = arith.addf %117, %118 : vector<8x96xf32>
    %120 = arith.addf %116, %119 : vector<8x96xf32>
    %121 = arith.negf %120 : vector<8x96xf32>
    %122 = math.exp %121 : vector<8x96xf32>
    %cst_53 = arith.constant 1.000000e+00 : f32
    %123 = vector.broadcast %cst_53 : f32 to vector<8x96xf32>
    %124 = arith.addf %123, %122 : vector<8x96xf32>
    %125 = arith.divf %123, %124 : vector<8x96xf32>
    %126 = vector.extract_strided_slice %125 {offsets = [0, 0], sizes = [8, 32], strides = [1, 1]} : vector<8x96xf32> to vector<8x32xf32>
    %127 = vector.extract_strided_slice %125 {offsets = [0, 32], sizes = [8, 32], strides = [1, 1]} : vector<8x96xf32> to vector<8x32xf32>
    %128 = vector.extract_strided_slice %116 {offsets = [0, 64], sizes = [8, 32], strides = [1, 1]} : vector<8x96xf32> to vector<8x32xf32>
    %129 = vector.extract_strided_slice %119 {offsets = [0, 64], sizes = [8, 32], strides = [1, 1]} : vector<8x96xf32> to vector<8x32xf32>
    %130 = arith.mulf %126, %129 : vector<8x32xf32>
    %131 = arith.addf %128, %130 : vector<8x32xf32>
    %132 = math.tanh %131 : vector<8x32xf32>
    %133 = arith.subf %93, %132 : vector<8x32xf32>
    %134 = arith.mulf %127, %133 : vector<8x32xf32>
    %135 = arith.addf %132, %134 : vector<8x32xf32>
    %c1_54 = arith.constant 1 : index
    %c40 = arith.constant 40 : index
    %c0_55 = arith.constant 0 : index
    %136 = vector.load %arg6[%c1_54, %c40, %c0_55] : memref<2x64x96xf32, #tpu.memory_space<vmem>>, vector<1x8x96xf32>
    %137 = vector.shape_cast %136 : vector<1x8x96xf32> to vector<8x96xf32>
    %cst_56 = arith.constant dense<0.000000e+00> : vector<8x96xf32>
    %138 = tpu.matmul %114, %24, %cst_56 {dimension_numbers = #tpu.dot_dimension_numbers<[1], [0], [0], [1], [0, 0, 1, 1], [], []>} : vector<8x32xf32>, vector<32x96xf32>, vector<8x96xf32> -> vector<8x96xf32>
    %139 = vector.broadcast %28 : vector<1x96xf32> to vector<8x96xf32>
    %140 = arith.addf %138, %139 : vector<8x96xf32>
    %141 = arith.addf %137, %140 : vector<8x96xf32>
    %142 = arith.negf %141 : vector<8x96xf32>
    %143 = math.exp %142 : vector<8x96xf32>
    %cst_57 = arith.constant 1.000000e+00 : f32
    %144 = vector.broadcast %cst_57 : f32 to vector<8x96xf32>
    %145 = arith.addf %144, %143 : vector<8x96xf32>
    %146 = arith.divf %144, %145 : vector<8x96xf32>
    %147 = vector.extract_strided_slice %146 {offsets = [0, 0], sizes = [8, 32], strides = [1, 1]} : vector<8x96xf32> to vector<8x32xf32>
    %148 = vector.extract_strided_slice %146 {offsets = [0, 32], sizes = [8, 32], strides = [1, 1]} : vector<8x96xf32> to vector<8x32xf32>
    %149 = vector.extract_strided_slice %137 {offsets = [0, 64], sizes = [8, 32], strides = [1, 1]} : vector<8x96xf32> to vector<8x32xf32>
    %150 = vector.extract_strided_slice %140 {offsets = [0, 64], sizes = [8, 32], strides = [1, 1]} : vector<8x96xf32> to vector<8x32xf32>
    %151 = arith.mulf %147, %150 : vector<8x32xf32>
    %152 = arith.addf %149, %151 : vector<8x32xf32>
    %153 = math.tanh %152 : vector<8x32xf32>
    %154 = arith.subf %114, %153 : vector<8x32xf32>
    %155 = arith.mulf %148, %154 : vector<8x32xf32>
    %156 = arith.addf %153, %155 : vector<8x32xf32>
    %c0_58 = arith.constant 0 : index
    %c24 = arith.constant 24 : index
    %c0_59 = arith.constant 0 : index
    %157 = vector.load %arg6[%c0_58, %c24, %c0_59] : memref<2x64x96xf32, #tpu.memory_space<vmem>>, vector<1x8x96xf32>
    %158 = vector.shape_cast %157 : vector<1x8x96xf32> to vector<8x96xf32>
    %cst_60 = arith.constant dense<0.000000e+00> : vector<8x96xf32>
    %159 = tpu.matmul %135, %22, %cst_60 {dimension_numbers = #tpu.dot_dimension_numbers<[1], [0], [0], [1], [0, 0, 1, 1], [], []>} : vector<8x32xf32>, vector<32x96xf32>, vector<8x96xf32> -> vector<8x96xf32>
    %160 = vector.broadcast %26 : vector<1x96xf32> to vector<8x96xf32>
    %161 = arith.addf %159, %160 : vector<8x96xf32>
    %162 = arith.addf %158, %161 : vector<8x96xf32>
    %163 = arith.negf %162 : vector<8x96xf32>
    %164 = math.exp %163 : vector<8x96xf32>
    %cst_61 = arith.constant 1.000000e+00 : f32
    %165 = vector.broadcast %cst_61 : f32 to vector<8x96xf32>
    %166 = arith.addf %165, %164 : vector<8x96xf32>
    %167 = arith.divf %165, %166 : vector<8x96xf32>
    %168 = vector.extract_strided_slice %167 {offsets = [0, 0], sizes = [8, 32], strides = [1, 1]} : vector<8x96xf32> to vector<8x32xf32>
    %169 = vector.extract_strided_slice %167 {offsets = [0, 32], sizes = [8, 32], strides = [1, 1]} : vector<8x96xf32> to vector<8x32xf32>
    %170 = vector.extract_strided_slice %158 {offsets = [0, 64], sizes = [8, 32], strides = [1, 1]} : vector<8x96xf32> to vector<8x32xf32>
    %171 = vector.extract_strided_slice %161 {offsets = [0, 64], sizes = [8, 32], strides = [1, 1]} : vector<8x96xf32> to vector<8x32xf32>
    %172 = arith.mulf %168, %171 : vector<8x32xf32>
    %173 = arith.addf %170, %172 : vector<8x32xf32>
    %174 = math.tanh %173 : vector<8x32xf32>
    %175 = arith.subf %135, %174 : vector<8x32xf32>
    %176 = arith.mulf %169, %175 : vector<8x32xf32>
    %177 = arith.addf %174, %176 : vector<8x32xf32>
    %c1_62 = arith.constant 1 : index
    %c32 = arith.constant 32 : index
    %c0_63 = arith.constant 0 : index
    %178 = vector.load %arg6[%c1_62, %c32, %c0_63] : memref<2x64x96xf32, #tpu.memory_space<vmem>>, vector<1x8x96xf32>
    %179 = vector.shape_cast %178 : vector<1x8x96xf32> to vector<8x96xf32>
    %cst_64 = arith.constant dense<0.000000e+00> : vector<8x96xf32>
    %180 = tpu.matmul %156, %24, %cst_64 {dimension_numbers = #tpu.dot_dimension_numbers<[1], [0], [0], [1], [0, 0, 1, 1], [], []>} : vector<8x32xf32>, vector<32x96xf32>, vector<8x96xf32> -> vector<8x96xf32>
    %181 = vector.broadcast %28 : vector<1x96xf32> to vector<8x96xf32>
    %182 = arith.addf %180, %181 : vector<8x96xf32>
    %183 = arith.addf %179, %182 : vector<8x96xf32>
    %184 = arith.negf %183 : vector<8x96xf32>
    %185 = math.exp %184 : vector<8x96xf32>
    %cst_65 = arith.constant 1.000000e+00 : f32
    %186 = vector.broadcast %cst_65 : f32 to vector<8x96xf32>
    %187 = arith.addf %186, %185 : vector<8x96xf32>
    %188 = arith.divf %186, %187 : vector<8x96xf32>
    %189 = vector.extract_strided_slice %188 {offsets = [0, 0], sizes = [8, 32], strides = [1, 1]} : vector<8x96xf32> to vector<8x32xf32>
    %190 = vector.extract_strided_slice %188 {offsets = [0, 32], sizes = [8, 32], strides = [1, 1]} : vector<8x96xf32> to vector<8x32xf32>
    %191 = vector.extract_strided_slice %179 {offsets = [0, 64], sizes = [8, 32], strides = [1, 1]} : vector<8x96xf32> to vector<8x32xf32>
    %192 = vector.extract_strided_slice %182 {offsets = [0, 64], sizes = [8, 32], strides = [1, 1]} : vector<8x96xf32> to vector<8x32xf32>
    %193 = arith.mulf %189, %192 : vector<8x32xf32>
    %194 = arith.addf %191, %193 : vector<8x32xf32>
    %195 = math.tanh %194 : vector<8x32xf32>
    %196 = arith.subf %156, %195 : vector<8x32xf32>
    %197 = arith.mulf %190, %196 : vector<8x32xf32>
    %198 = arith.addf %195, %197 : vector<8x32xf32>
    %c0_66 = arith.constant 0 : index
    %c32_67 = arith.constant 32 : index
    %c0_68 = arith.constant 0 : index
    %199 = vector.load %arg6[%c0_66, %c32_67, %c0_68] : memref<2x64x96xf32, #tpu.memory_space<vmem>>, vector<1x8x96xf32>
    %200 = vector.shape_cast %199 : vector<1x8x96xf32> to vector<8x96xf32>
    %cst_69 = arith.constant dense<0.000000e+00> : vector<8x96xf32>
    %201 = tpu.matmul %177, %22, %cst_69 {dimension_numbers = #tpu.dot_dimension_numbers<[1], [0], [0], [1], [0, 0, 1, 1], [], []>} : vector<8x32xf32>, vector<32x96xf32>, vector<8x96xf32> -> vector<8x96xf32>
    %202 = vector.broadcast %26 : vector<1x96xf32> to vector<8x96xf32>
    %203 = arith.addf %201, %202 : vector<8x96xf32>
    %204 = arith.addf %200, %203 : vector<8x96xf32>
    %205 = arith.negf %204 : vector<8x96xf32>
    %206 = math.exp %205 : vector<8x96xf32>
    %cst_70 = arith.constant 1.000000e+00 : f32
    %207 = vector.broadcast %cst_70 : f32 to vector<8x96xf32>
    %208 = arith.addf %207, %206 : vector<8x96xf32>
    %209 = arith.divf %207, %208 : vector<8x96xf32>
    %210 = vector.extract_strided_slice %209 {offsets = [0, 0], sizes = [8, 32], strides = [1, 1]} : vector<8x96xf32> to vector<8x32xf32>
    %211 = vector.extract_strided_slice %209 {offsets = [0, 32], sizes = [8, 32], strides = [1, 1]} : vector<8x96xf32> to vector<8x32xf32>
    %212 = vector.extract_strided_slice %200 {offsets = [0, 64], sizes = [8, 32], strides = [1, 1]} : vector<8x96xf32> to vector<8x32xf32>
    %213 = vector.extract_strided_slice %203 {offsets = [0, 64], sizes = [8, 32], strides = [1, 1]} : vector<8x96xf32> to vector<8x32xf32>
    %214 = arith.mulf %210, %213 : vector<8x32xf32>
    %215 = arith.addf %212, %214 : vector<8x32xf32>
    %216 = math.tanh %215 : vector<8x32xf32>
    %217 = arith.subf %177, %216 : vector<8x32xf32>
    %218 = arith.mulf %211, %217 : vector<8x32xf32>
    %219 = arith.addf %216, %218 : vector<8x32xf32>
    %c1_71 = arith.constant 1 : index
    %c24_72 = arith.constant 24 : index
    %c0_73 = arith.constant 0 : index
    %220 = vector.load %arg6[%c1_71, %c24_72, %c0_73] : memref<2x64x96xf32, #tpu.memory_space<vmem>>, vector<1x8x96xf32>
    %221 = vector.shape_cast %220 : vector<1x8x96xf32> to vector<8x96xf32>
    %cst_74 = arith.constant dense<0.000000e+00> : vector<8x96xf32>
    %222 = tpu.matmul %198, %24, %cst_74 {dimension_numbers = #tpu.dot_dimension_numbers<[1], [0], [0], [1], [0, 0, 1, 1], [], []>} : vector<8x32xf32>, vector<32x96xf32>, vector<8x96xf32> -> vector<8x96xf32>
    %223 = vector.broadcast %28 : vector<1x96xf32> to vector<8x96xf32>
    %224 = arith.addf %222, %223 : vector<8x96xf32>
    %225 = arith.addf %221, %224 : vector<8x96xf32>
    %226 = arith.negf %225 : vector<8x96xf32>
    %227 = math.exp %226 : vector<8x96xf32>
    %cst_75 = arith.constant 1.000000e+00 : f32
    %228 = vector.broadcast %cst_75 : f32 to vector<8x96xf32>
    %229 = arith.addf %228, %227 : vector<8x96xf32>
    %230 = arith.divf %228, %229 : vector<8x96xf32>
    %231 = vector.extract_strided_slice %230 {offsets = [0, 0], sizes = [8, 32], strides = [1, 1]} : vector<8x96xf32> to vector<8x32xf32>
    %232 = vector.extract_strided_slice %230 {offsets = [0, 32], sizes = [8, 32], strides = [1, 1]} : vector<8x96xf32> to vector<8x32xf32>
    %233 = vector.extract_strided_slice %221 {offsets = [0, 64], sizes = [8, 32], strides = [1, 1]} : vector<8x96xf32> to vector<8x32xf32>
    %234 = vector.extract_strided_slice %224 {offsets = [0, 64], sizes = [8, 32], strides = [1, 1]} : vector<8x96xf32> to vector<8x32xf32>
    %235 = arith.mulf %231, %234 : vector<8x32xf32>
    %236 = arith.addf %233, %235 : vector<8x32xf32>
    %237 = math.tanh %236 : vector<8x32xf32>
    %238 = arith.subf %198, %237 : vector<8x32xf32>
    %239 = arith.mulf %232, %238 : vector<8x32xf32>
    %240 = arith.addf %237, %239 : vector<8x32xf32>
    %c0_76 = arith.constant 0 : index
    %c40_77 = arith.constant 40 : index
    %c0_78 = arith.constant 0 : index
    %241 = vector.load %arg6[%c0_76, %c40_77, %c0_78] : memref<2x64x96xf32, #tpu.memory_space<vmem>>, vector<1x8x96xf32>
    %242 = vector.shape_cast %241 : vector<1x8x96xf32> to vector<8x96xf32>
    %cst_79 = arith.constant dense<0.000000e+00> : vector<8x96xf32>
    %243 = tpu.matmul %219, %22, %cst_79 {dimension_numbers = #tpu.dot_dimension_numbers<[1], [0], [0], [1], [0, 0, 1, 1], [], []>} : vector<8x32xf32>, vector<32x96xf32>, vector<8x96xf32> -> vector<8x96xf32>
    %244 = vector.broadcast %26 : vector<1x96xf32> to vector<8x96xf32>
    %245 = arith.addf %243, %244 : vector<8x96xf32>
    %246 = arith.addf %242, %245 : vector<8x96xf32>
    %247 = arith.negf %246 : vector<8x96xf32>
    %248 = math.exp %247 : vector<8x96xf32>
    %cst_80 = arith.constant 1.000000e+00 : f32
    %249 = vector.broadcast %cst_80 : f32 to vector<8x96xf32>
    %250 = arith.addf %249, %248 : vector<8x96xf32>
    %251 = arith.divf %249, %250 : vector<8x96xf32>
    %252 = vector.extract_strided_slice %251 {offsets = [0, 0], sizes = [8, 32], strides = [1, 1]} : vector<8x96xf32> to vector<8x32xf32>
    %253 = vector.extract_strided_slice %251 {offsets = [0, 32], sizes = [8, 32], strides = [1, 1]} : vector<8x96xf32> to vector<8x32xf32>
    %254 = vector.extract_strided_slice %242 {offsets = [0, 64], sizes = [8, 32], strides = [1, 1]} : vector<8x96xf32> to vector<8x32xf32>
    %255 = vector.extract_strided_slice %245 {offsets = [0, 64], sizes = [8, 32], strides = [1, 1]} : vector<8x96xf32> to vector<8x32xf32>
    %256 = arith.mulf %252, %255 : vector<8x32xf32>
    %257 = arith.addf %254, %256 : vector<8x32xf32>
    %258 = math.tanh %257 : vector<8x32xf32>
    %259 = arith.subf %219, %258 : vector<8x32xf32>
    %260 = arith.mulf %253, %259 : vector<8x32xf32>
    %261 = arith.addf %258, %260 : vector<8x32xf32>
    %c1_81 = arith.constant 1 : index
    %c16_82 = arith.constant 16 : index
    %c0_83 = arith.constant 0 : index
    %262 = vector.load %arg6[%c1_81, %c16_82, %c0_83] : memref<2x64x96xf32, #tpu.memory_space<vmem>>, vector<1x8x96xf32>
    %263 = vector.shape_cast %262 : vector<1x8x96xf32> to vector<8x96xf32>
    %cst_84 = arith.constant dense<0.000000e+00> : vector<8x96xf32>
    %264 = tpu.matmul %240, %24, %cst_84 {dimension_numbers = #tpu.dot_dimension_numbers<[1], [0], [0], [1], [0, 0, 1, 1], [], []>} : vector<8x32xf32>, vector<32x96xf32>, vector<8x96xf32> -> vector<8x96xf32>
    %265 = vector.broadcast %28 : vector<1x96xf32> to vector<8x96xf32>
    %266 = arith.addf %264, %265 : vector<8x96xf32>
    %267 = arith.addf %263, %266 : vector<8x96xf32>
    %268 = arith.negf %267 : vector<8x96xf32>
    %269 = math.exp %268 : vector<8x96xf32>
    %cst_85 = arith.constant 1.000000e+00 : f32
    %270 = vector.broadcast %cst_85 : f32 to vector<8x96xf32>
    %271 = arith.addf %270, %269 : vector<8x96xf32>
    %272 = arith.divf %270, %271 : vector<8x96xf32>
    %273 = vector.extract_strided_slice %272 {offsets = [0, 0], sizes = [8, 32], strides = [1, 1]} : vector<8x96xf32> to vector<8x32xf32>
    %274 = vector.extract_strided_slice %272 {offsets = [0, 32], sizes = [8, 32], strides = [1, 1]} : vector<8x96xf32> to vector<8x32xf32>
    %275 = vector.extract_strided_slice %263 {offsets = [0, 64], sizes = [8, 32], strides = [1, 1]} : vector<8x96xf32> to vector<8x32xf32>
    %276 = vector.extract_strided_slice %266 {offsets = [0, 64], sizes = [8, 32], strides = [1, 1]} : vector<8x96xf32> to vector<8x32xf32>
    %277 = arith.mulf %273, %276 : vector<8x32xf32>
    %278 = arith.addf %275, %277 : vector<8x32xf32>
    %279 = math.tanh %278 : vector<8x32xf32>
    %280 = arith.subf %240, %279 : vector<8x32xf32>
    %281 = arith.mulf %274, %280 : vector<8x32xf32>
    %282 = arith.addf %279, %281 : vector<8x32xf32>
    %c0_86 = arith.constant 0 : index
    %c48_87 = arith.constant 48 : index
    %c0_88 = arith.constant 0 : index
    %283 = vector.load %arg6[%c0_86, %c48_87, %c0_88] : memref<2x64x96xf32, #tpu.memory_space<vmem>>, vector<1x8x96xf32>
    %284 = vector.shape_cast %283 : vector<1x8x96xf32> to vector<8x96xf32>
    %cst_89 = arith.constant dense<0.000000e+00> : vector<8x96xf32>
    %285 = tpu.matmul %261, %22, %cst_89 {dimension_numbers = #tpu.dot_dimension_numbers<[1], [0], [0], [1], [0, 0, 1, 1], [], []>} : vector<8x32xf32>, vector<32x96xf32>, vector<8x96xf32> -> vector<8x96xf32>
    %286 = vector.broadcast %26 : vector<1x96xf32> to vector<8x96xf32>
    %287 = arith.addf %285, %286 : vector<8x96xf32>
    %288 = arith.addf %284, %287 : vector<8x96xf32>
    %289 = arith.negf %288 : vector<8x96xf32>
    %290 = math.exp %289 : vector<8x96xf32>
    %cst_90 = arith.constant 1.000000e+00 : f32
    %291 = vector.broadcast %cst_90 : f32 to vector<8x96xf32>
    %292 = arith.addf %291, %290 : vector<8x96xf32>
    %293 = arith.divf %291, %292 : vector<8x96xf32>
    %294 = vector.extract_strided_slice %293 {offsets = [0, 0], sizes = [8, 32], strides = [1, 1]} : vector<8x96xf32> to vector<8x32xf32>
    %295 = vector.extract_strided_slice %293 {offsets = [0, 32], sizes = [8, 32], strides = [1, 1]} : vector<8x96xf32> to vector<8x32xf32>
    %296 = vector.extract_strided_slice %284 {offsets = [0, 64], sizes = [8, 32], strides = [1, 1]} : vector<8x96xf32> to vector<8x32xf32>
    %297 = vector.extract_strided_slice %287 {offsets = [0, 64], sizes = [8, 32], strides = [1, 1]} : vector<8x96xf32> to vector<8x32xf32>
    %298 = arith.mulf %294, %297 : vector<8x32xf32>
    %299 = arith.addf %296, %298 : vector<8x32xf32>
    %300 = math.tanh %299 : vector<8x32xf32>
    %301 = arith.subf %261, %300 : vector<8x32xf32>
    %302 = arith.mulf %295, %301 : vector<8x32xf32>
    %303 = arith.addf %300, %302 : vector<8x32xf32>
    %c1_91 = arith.constant 1 : index
    %c8_92 = arith.constant 8 : index
    %c0_93 = arith.constant 0 : index
    %304 = vector.load %arg6[%c1_91, %c8_92, %c0_93] : memref<2x64x96xf32, #tpu.memory_space<vmem>>, vector<1x8x96xf32>
    %305 = vector.shape_cast %304 : vector<1x8x96xf32> to vector<8x96xf32>
    %cst_94 = arith.constant dense<0.000000e+00> : vector<8x96xf32>
    %306 = tpu.matmul %282, %24, %cst_94 {dimension_numbers = #tpu.dot_dimension_numbers<[1], [0], [0], [1], [0, 0, 1, 1], [], []>} : vector<8x32xf32>, vector<32x96xf32>, vector<8x96xf32> -> vector<8x96xf32>
    %307 = vector.broadcast %28 : vector<1x96xf32> to vector<8x96xf32>
    %308 = arith.addf %306, %307 : vector<8x96xf32>
    %309 = arith.addf %305, %308 : vector<8x96xf32>
    %310 = arith.negf %309 : vector<8x96xf32>
    %311 = math.exp %310 : vector<8x96xf32>
    %cst_95 = arith.constant 1.000000e+00 : f32
    %312 = vector.broadcast %cst_95 : f32 to vector<8x96xf32>
    %313 = arith.addf %312, %311 : vector<8x96xf32>
    %314 = arith.divf %312, %313 : vector<8x96xf32>
    %315 = vector.extract_strided_slice %314 {offsets = [0, 0], sizes = [8, 32], strides = [1, 1]} : vector<8x96xf32> to vector<8x32xf32>
    %316 = vector.extract_strided_slice %314 {offsets = [0, 32], sizes = [8, 32], strides = [1, 1]} : vector<8x96xf32> to vector<8x32xf32>
    %317 = vector.extract_strided_slice %305 {offsets = [0, 64], sizes = [8, 32], strides = [1, 1]} : vector<8x96xf32> to vector<8x32xf32>
    %318 = vector.extract_strided_slice %308 {offsets = [0, 64], sizes = [8, 32], strides = [1, 1]} : vector<8x96xf32> to vector<8x32xf32>
    %319 = arith.mulf %315, %318 : vector<8x32xf32>
    %320 = arith.addf %317, %319 : vector<8x32xf32>
    %321 = math.tanh %320 : vector<8x32xf32>
    %322 = arith.subf %282, %321 : vector<8x32xf32>
    %323 = arith.mulf %316, %322 : vector<8x32xf32>
    %324 = arith.addf %321, %323 : vector<8x32xf32>
    %c0_96 = arith.constant 0 : index
    %c56_97 = arith.constant 56 : index
    %c0_98 = arith.constant 0 : index
    %325 = vector.load %arg6[%c0_96, %c56_97, %c0_98] : memref<2x64x96xf32, #tpu.memory_space<vmem>>, vector<1x8x96xf32>
    %326 = vector.shape_cast %325 : vector<1x8x96xf32> to vector<8x96xf32>
    %cst_99 = arith.constant dense<0.000000e+00> : vector<8x96xf32>
    %327 = tpu.matmul %303, %22, %cst_99 {dimension_numbers = #tpu.dot_dimension_numbers<[1], [0], [0], [1], [0, 0, 1, 1], [], []>} : vector<8x32xf32>, vector<32x96xf32>, vector<8x96xf32> -> vector<8x96xf32>
    %328 = vector.broadcast %26 : vector<1x96xf32> to vector<8x96xf32>
    %329 = arith.addf %327, %328 : vector<8x96xf32>
    %330 = arith.addf %326, %329 : vector<8x96xf32>
    %331 = arith.negf %330 : vector<8x96xf32>
    %332 = math.exp %331 : vector<8x96xf32>
    %cst_100 = arith.constant 1.000000e+00 : f32
    %333 = vector.broadcast %cst_100 : f32 to vector<8x96xf32>
    %334 = arith.addf %333, %332 : vector<8x96xf32>
    %335 = arith.divf %333, %334 : vector<8x96xf32>
    %336 = vector.extract_strided_slice %335 {offsets = [0, 0], sizes = [8, 32], strides = [1, 1]} : vector<8x96xf32> to vector<8x32xf32>
    %337 = vector.extract_strided_slice %335 {offsets = [0, 32], sizes = [8, 32], strides = [1, 1]} : vector<8x96xf32> to vector<8x32xf32>
    %338 = vector.extract_strided_slice %326 {offsets = [0, 64], sizes = [8, 32], strides = [1, 1]} : vector<8x96xf32> to vector<8x32xf32>
    %339 = vector.extract_strided_slice %329 {offsets = [0, 64], sizes = [8, 32], strides = [1, 1]} : vector<8x96xf32> to vector<8x32xf32>
    %340 = arith.mulf %336, %339 : vector<8x32xf32>
    %341 = arith.addf %338, %340 : vector<8x32xf32>
    %342 = math.tanh %341 : vector<8x32xf32>
    %343 = arith.subf %303, %342 : vector<8x32xf32>
    %344 = arith.mulf %337, %343 : vector<8x32xf32>
    %345 = arith.addf %342, %344 : vector<8x32xf32>
    %c1_101 = arith.constant 1 : index
    %c0_102 = arith.constant 0 : index
    %c0_103 = arith.constant 0 : index
    %346 = vector.load %arg6[%c1_101, %c0_102, %c0_103] : memref<2x64x96xf32, #tpu.memory_space<vmem>>, vector<1x8x96xf32>
    %347 = vector.shape_cast %346 : vector<1x8x96xf32> to vector<8x96xf32>
    %cst_104 = arith.constant dense<0.000000e+00> : vector<8x96xf32>
    %348 = tpu.matmul %324, %24, %cst_104 {dimension_numbers = #tpu.dot_dimension_numbers<[1], [0], [0], [1], [0, 0, 1, 1], [], []>} : vector<8x32xf32>, vector<32x96xf32>, vector<8x96xf32> -> vector<8x96xf32>
    %349 = vector.broadcast %28 : vector<1x96xf32> to vector<8x96xf32>
    %350 = arith.addf %348, %349 : vector<8x96xf32>
    %351 = arith.addf %347, %350 : vector<8x96xf32>
    %352 = arith.negf %351 : vector<8x96xf32>
    %353 = math.exp %352 : vector<8x96xf32>
    %cst_105 = arith.constant 1.000000e+00 : f32
    %354 = vector.broadcast %cst_105 : f32 to vector<8x96xf32>
    %355 = arith.addf %354, %353 : vector<8x96xf32>
    %356 = arith.divf %354, %355 : vector<8x96xf32>
    %357 = vector.extract_strided_slice %356 {offsets = [0, 0], sizes = [8, 32], strides = [1, 1]} : vector<8x96xf32> to vector<8x32xf32>
    %358 = vector.extract_strided_slice %356 {offsets = [0, 32], sizes = [8, 32], strides = [1, 1]} : vector<8x96xf32> to vector<8x32xf32>
    %359 = vector.extract_strided_slice %347 {offsets = [0, 64], sizes = [8, 32], strides = [1, 1]} : vector<8x96xf32> to vector<8x32xf32>
    %360 = vector.extract_strided_slice %350 {offsets = [0, 64], sizes = [8, 32], strides = [1, 1]} : vector<8x96xf32> to vector<8x32xf32>
    %361 = arith.mulf %357, %360 : vector<8x32xf32>
    %362 = arith.addf %359, %361 : vector<8x32xf32>
    %363 = math.tanh %362 : vector<8x32xf32>
    %364 = arith.subf %324, %363 : vector<8x32xf32>
    %365 = arith.mulf %358, %364 : vector<8x32xf32>
    %366 = arith.addf %363, %365 : vector<8x32xf32>
    %367 = vector.extract_strided_slice %345 {offsets = [3, 0], sizes = [1, 32], strides = [1, 1]} : vector<8x32xf32> to vector<1x32xf32>
    %c0_106 = arith.constant 0 : index
    %c0_107 = arith.constant 0 : index
    %368 = vector.load %arg5[%c0_106, %c0_107] : memref<2x32xf32, #tpu.memory_space<vmem>>, vector<1x32xf32>
    tpu.vector_store %arg5[%c0_106, %c0_107], %367 {strides = array<i32>} : memref<2x32xf32, #tpu.memory_space<vmem>>, vector<1x32xf32>,
    %369 = vector.extract_strided_slice %366 {offsets = [3, 0], sizes = [1, 32], strides = [1, 1]} : vector<8x32xf32> to vector<1x32xf32>
    %c1_108 = arith.constant 1 : index
    %c0_109 = arith.constant 0 : index
    %370 = vector.load %arg5[%c1_108, %c0_109] : memref<2x32xf32, #tpu.memory_space<vmem>>, vector<1x32xf32>
    tpu.vector_store %arg5[%c1_108, %c0_109], %369 {strides = array<i32>} : memref<2x32xf32, #tpu.memory_space<vmem>>, vector<1x32xf32>,
    return
  }
}

</mosaic_0001>

<llo_original>
// kernel: bigru_forward.1
$region0: #{bigru_forward.1}
  #allocation0 [shape = 'u32[]', space=smem, size = 0x4, offset = 0x4, fixed_abs, tag = 'smem constant byte address 0x4 - core index']
  #allocation1 [shape = 'u32[72,128]{1,0:T(1,128)}', space=vmem, size = 0x9000, scoped, tag = 'internal scratch']
  #allocation2 [shape = 'f32[2,64,96]{2,1,0:T(8,128)}', space=vmem, size = 0x10000, scoped, tag = 'scratch operand']
  %s0 = inlined_call_operand.vmem [shape: f32[64,32], index: 0, kind: input, shape index: {}]
  %s1 = inlined_call_operand.vmem [shape: f32[2,32,96], index: 1, kind: input, shape index: {}]
  %s2 = inlined_call_operand.vmem [shape: f32[2,1,96], index: 2, kind: input, shape index: {}]
  %s3 = inlined_call_operand.hbm [shape: f32[2,32,96], index: 3, kind: input, shape index: {}]
  %s4 = inlined_call_operand.vmem [shape: f32[2,1,96], index: 4, kind: input, shape index: {}]
  %s5 = inlined_call_operand.vmem [shape: f32[2,32], index: 5, kind: output, shape index: {}]
  %s6 = sld [smem:[#allocation0]]
  $region34: #{bigru_forward.1} parent=0
    _
  %s8 = ssub.s32 1, %s6
  %s9 = scalar_select 0, %s8, %s6
  $region1: #{bigru_forward.1} parent=0
    #allocation3 [shape = 'u8[32768]{0}', space=vmem, size = 0x8000, scoped, tag = 'input window, operand 3, single buffered']
    #allocation4 [shape = 's32[1]{0}', space=sflag, size = 0x4, scoped, tag = 'scoped memory for bigru_forward.1']
    %10 = vsyncpa [#allocation4], 0
    // Predicated region
    $region2: #{bigru_forward.1} parent=1 // pred_check
      _
    $region3: #{bigru_forward.1} parent=1 // pred_check_branch
      %12 = sbr.rel (0) target = $region5
    $region4: #{bigru_forward.1} parent=1 // pred_region
      _
    $region5: #{bigru_forward.1} parent=1 // pred_fallthru
      _
    // Predicated region
    $region6: #{bigru_forward.1} parent=1 // pred_check
      _
    $region7: #{bigru_forward.1} parent=1 // pred_check_branch
      %14 = sbr.rel (0) target = $region9
    $region8: #{bigru_forward.1} parent=1 // pred_region
      _
    $region9: #{bigru_forward.1} parent=1 // pred_fallthru
      _
    // Predicated region
    $region10: #{bigru_forward.1} parent=1 // pred_check
      _
    $region11: #{bigru_forward.1} parent=1 // pred_check_branch
      %16 = sbr.rel (0) target = $region13
    $region12: #{bigru_forward.1} parent=1 // pred_region
      _
    $region13: #{bigru_forward.1} parent=1 // pred_fallthru
      _
    // Predicated region
    $region14: #{bigru_forward.1} parent=1 // pred_check
      _
    $region15: #{bigru_forward.1} parent=1 // pred_check_branch
      %18 = sbr.rel (0) target = $region17
    $region16: #{bigru_forward.1} parent=1 // pred_region
      %20 = vsyncadd [#allocation4], 0
      %s21 = sshll.u32 %s3, 4
      %s22 = int_to_ptr.hbm [resolvable:$true] %s21
      %s23 = sshll.u32 [#allocation3], 4
      %s24 = int_to_ptr.vmem [resolvable:$true] %s23
      %29 = dma.hbm_to_vmem [thread:$0]  %s22, 1024, %s24, [#allocation4], 128, 128, 8
    $region17: #{bigru_forward.1} parent=1 // pred_fallthru
      _
    // Predicated region
    $region18: #{bigru_forward.1} parent=1 // pred_check
      _
    $region19: #{bigru_forward.1} parent=1 // pred_check_branch
      %31 = sbr.rel (0) target = $region21
    $region20: #{bigru_forward.1} parent=1 // pred_region
      _
    $region21: #{bigru_forward.1} parent=1 // pred_fallthru
      _
    // Predicated region
    $region22: #{bigru_forward.1} parent=1 // pred_check
      _
    $region23: #{bigru_forward.1} parent=1 // pred_check_branch
      %33 = sbr.rel (0) target = $region25
    $region24: #{bigru_forward.1} parent=1 // pred_region
      %35 = dma.done [#allocation4], 1024
    $region25: #{bigru_forward.1} parent=1 // pred_fallthru
      _
    %v36 = vld [vmem:[%s0] sm:$0xff]
    %v37 = vld [vmem:[%s0 + $0x8] sm:$0xff]
    %v38 = vld [vmem:[%s0 + $0x10] sm:$0xff]
    %v39 = vld [vmem:[%s0 + $0x18] sm:$0xff]
    %v40 = vld [vmem:[%s0 + $0x20] sm:$0xff]
    %v41 = vld [vmem:[%s0 + $0x28] sm:$0xff]
    %v42 = vld [vmem:[%s0 + $0x30] sm:$0xff]
    %v43 = vld [vmem:[%s0 + $0x38] sm:$0xff]
    %v44 = vld [vmem:[%s1] sm:$0xff]
    %v45 = vld [vmem:[%s1 + $0x8] sm:$0xff]
    %v46 = vld [vmem:[%s1 + $0x10] sm:$0xff]
    %v47 = vld [vmem:[%s1 + $0x18] sm:$0xff]
    %v48 = vld [vmem:[%s2] sm:$0x1]
    %v50 = vperm.slane %v48, 0
    %vm52 = vcmask 261120
    %v54 = vsel %vm52, %v36, 0
    %v57 = vsel %vm52, %v37, 0
    %v60 = vsel %vm52, %v38, 0
    %v63 = vsel %vm52, %v39, 0
    %v66 = vsel %vm52, %v40, 0
    %v69 = vsel %vm52, %v41, 0
    %v72 = vsel %vm52, %v42, 0
    %v75 = vsel %vm52, %v43, 0
    %77 = vmatpush.msra.mxu0 0.0
    %78 = vmatpush.msra.mxu0 0.0
    %79 = vmatpush.msra.mxu0 0.0
    %80 = vmatpush.msra.mxu0 0.0
    %81 = vmatpush.msra.mxu0 0.0
    %82 = vmatpush.msra.mxu0 0.0
    %83 = vmatpush.msra.mxu0 0.0
    %84 = vmatpush.msra.mxu0 0.0
    %85 = vmatpush.msra.mxu0 0.0
    %86 = vmatpush.msra.mxu0 0.0
    %87 = vmatpush.msra.mxu0 0.0
    %88 = vmatpush.msra.mxu0 0.0
    %89 = vmatpush.msra.mxu0 %v47
    %90 = vmatpush.msra.mxu0 %v46
    %91 = vmatpush.msra.mxu0 %v45
    %92 = vmatpush.msra.mxu0 %v44
    %93 = vmatmul.f32.gmra.mxu0 %v54
    %v94 = vpop.f32.mrf.mxu0
    %v95 = vadd.f32 %v50, %v94
    %96 = vmatmul.f32.gmra.mxu0 %v57
    %v97 = vpop.f32.mrf.mxu0
    %v98 = vadd.f32 %v50, %v97
    %99 = vmatmul.f32.gmra.mxu0 %v60
    %v100 = vpop.f32.mrf.mxu0
    %v101 = vadd.f32 %v50, %v100
    %102 = vmatmul.f32.gmra.mxu0 %v63
    %v103 = vpop.f32.mrf.mxu0
    %v104 = vadd.f32 %v50, %v103
    %105 = vmatmul.f32.gmra.mxu0 %v66
    %v106 = vpop.f32.mrf.mxu0
    %v107 = vadd.f32 %v50, %v106
    %108 = vmatmul.f32.gmra.mxu0 %v69
    %v109 = vpop.f32.mrf.mxu0
    %v110 = vadd.f32 %v50, %v109
    %111 = vmatmul.f32.gmra.mxu0 %v72
    %v112 = vpop.f32.mrf.mxu0
    %v113 = vadd.f32 %v50, %v112
    %114 = vmatmul.f32.gmra.mxu0 %v75
    %v115 = vpop.f32.mrf.mxu0
    %v116 = vadd.f32 %v50, %v115
    %117 = vdwg.mxu0
    %vm118 = vcmask 785408
    %119 = vst.msk [vmem:[#allocation2] sm:$0xff] %vm118, %v95
    %120 = vst.msk [vmem:[#allocation2 + $0x8] sm:$0xff] %vm118, %v98
    %121 = vst.msk [vmem:[#allocation2 + $0x10] sm:$0xff] %vm118, %v101
    %122 = vst.msk [vmem:[#allocation2 + $0x18] sm:$0xff] %vm118, %v104
    %123 = vst.msk [vmem:[#allocation2 + $0x20] sm:$0xff] %vm118, %v107
    %124 = vst.msk [vmem:[#allocation2 + $0x28] sm:$0xff] %vm118, %v110
    %125 = vst.msk [vmem:[#allocation2 + $0x30] sm:$0xff] %vm118, %v113
    %126 = vst.msk [vmem:[#allocation2 + $0x38] sm:$0xff] %vm118, %v116
    %s127 = scalar_lea.vmem %s1, 32
    %v128 = vld [vmem:[%s127] sm:$0xff]
    %v129 = vld [vmem:[%s127 + $0x8] sm:$0xff]
    %v130 = vld [vmem:[%s127 + $0x10] sm:$0xff]
    %v131 = vld [vmem:[%s127 + $0x18] sm:$0xff]
    %s132 = scalar_lea.vmem %s2, 1
    %v133 = vld [vmem:[%s132] sm:$0x1]
    %v135 = vperm.slane %v133, 0
    %137 = vmatpush.msra.mxu0 0.0
    %138 = vmatpush.msra.mxu0 0.0
    %139 = vmatpush.msra.mxu0 0.0
    %140 = vmatpush.msra.mxu0 0.0
    %141 = vmatpush.msra.mxu0 0.0
    %142 = vmatpush.msra.mxu0 0.0
    %143 = vmatpush.msra.mxu0 0.0
    %144 = vmatpush.msra.mxu0 0.0
    %145 = vmatpush.msra.mxu0 0.0
    %146 = vmatpush.msra.mxu0 0.0
    %147 = vmatpush.msra.mxu0 0.0
    %148 = vmatpush.msra.mxu0 0.0
    %149 = vmatpush.msra.mxu0 %v131
    %150 = vmatpush.msra.mxu0 %v130
    %151 = vmatpush.msra.mxu0 %v129
    %152 = vmatpush.msra.mxu0 %v128
    %153 = vmatmul.f32.gmra.mxu0 %v54
    %v154 = vpop.f32.mrf.mxu0
    %v155 = vadd.f32 %v135, %v154
    %156 = vmatmul.f32.gmra.mxu0 %v57
    %v157 = vpop.f32.mrf.mxu0
    %v158 = vadd.f32 %v135, %v157
    %159 = vmatmul.f32.gmra.mxu0 %v60
    %v160 = vpop.f32.mrf.mxu0
    %v161 = vadd.f32 %v135, %v160
    %162 = vmatmul.f32.gmra.mxu0 %v63
    %v163 = vpop.f32.mrf.mxu0
    %v164 = vadd.f32 %v135, %v163
    %165 = vmatmul.f32.gmra.mxu0 %v66
    %v166 = vpop.f32.mrf.mxu0
    %v167 = vadd.f32 %v135, %v166
    %168 = vmatmul.f32.gmra.mxu0 %v69
    %v169 = vpop.f32.mrf.mxu0
    %v170 = vadd.f32 %v135, %v169
    %171 = vmatmul.f32.gmra.mxu0 %v72
    %v172 = vpop.f32.mrf.mxu0
    %v173 = vadd.f32 %v135, %v172
    %174 = vmatmul.f32.gmra.mxu0 %v75
    %v175 = vpop.f32.mrf.mxu0
    %v176 = vadd.f32 %v135, %v175
    %177 = vdwg.mxu0
    %s178 = scalar_lea.vmem [#allocation2], 64
    %179 = vst.msk [vmem:[%s178] sm:$0xff] %vm118, %v155
    %180 = vst.msk [vmem:[%s178 + $0x8] sm:$0xff] %vm118, %v158
    %181 = vst.msk [vmem:[%s178 + $0x10] sm:$0xff] %vm118, %v161
    %182 = vst.msk [vmem:[%s178 + $0x18] sm:$0xff] %vm118, %v164
    %183 = vst.msk [vmem:[%s178 + $0x20] sm:$0xff] %vm118, %v167
    %184 = vst.msk [vmem:[%s178 + $0x28] sm:$0xff] %vm118, %v170
    %185 = vst.msk [vmem:[%s178 + $0x30] sm:$0xff] %vm118, %v173
    %186 = vst.msk [vmem:[%s178 + $0x38] sm:$0xff] %vm118, %v176
    %v187 = vld [vmem:[#allocation3] sm:$0xff]
    %v188 = vld [vmem:[#allocation3 + $0x8] sm:$0xff]
    %v189 = vld [vmem:[#allocation3 + $0x10] sm:$0xff]
    %v190 = vld [vmem:[#allocation3 + $0x18] sm:$0xff]
    %s191 = scalar_lea.vmem [#allocation3], 32
    %v192 = vld [vmem:[%s191] sm:$0xff]
    %v193 = vld [vmem:[%s191 + $0x8] sm:$0xff]
    %v194 = vld [vmem:[%s191 + $0x10] sm:$0xff]
    %v195 = vld [vmem:[%s191 + $0x18] sm:$0xff]
    %v196 = vld [vmem:[%s4] sm:$0x1]
    %s197 = scalar_lea.vmem %s4, 1
    %v198 = vld [vmem:[%s197] sm:$0x1]
    %v199 = vld [vmem:[#allocation2] sm:$0xff]
    %v201 = vperm.slane %v196, 0
    %v204 = vsel %vm52, 0.0, 0
    %206 = vmatpush.msra.mxu0 0.0
    %207 = vmatpush.msra.mxu0 0.0
    %208 = vmatpush.msra.mxu0 0.0
    %209 = vmatpush.msra.mxu0 0.0
    %210 = vmatpush.msra.mxu0 0.0
    %211 = vmatpush.msra.mxu0 0.0
    %212 = vmatpush.msra.mxu0 0.0
    %213 = vmatpush.msra.mxu0 0.0
    %214 = vmatpush.msra.mxu0 0.0
    %215 = vmatpush.msra.mxu0 0.0
    %216 = vmatpush.msra.mxu0 0.0
    %217 = vmatpush.msra.mxu0 0.0
    %218 = vmatpush.msra.mxu0 %v190
    %219 = vmatpush.msra.mxu0 %v189
    %220 = vmatpush.msra.mxu0 %v188
    %221 = vmatpush.msra.mxu0 %v187
    %222 = vmatmul.f32.gmra.mxu0 %v204
    %v223 = vpop.f32.mrf.mxu0
    %v224 = vadd.f32 %v201, %v223
    %225 = vdwg.mxu0
    %v226 = vadd.f32 %v199, %v224
    %v227 = vxor.u32 %v226, 2147483648
    %v228 = vmul.f32 %v227, 1.442695
    %v229 = vpow.pop %v228
    %v230 = vadd.f32 %v229, 1.0
    %v231 = vrcp.pop %v230
    %v232 = vmul.f32 %v230, %v231
    %v233 = vsub.f32 1.0, %v232
    %v234 = vmul.f32 %v231, %v233
    %v235 = vadd.f32 %v231, %v234
    %vm236 = vweird.f32 %v230
    %vm237 = vweird.f32 %v231
    %vm238 = vmor %vm236, %vm237
    %v239 = vsel %vm238, %v231, %v235
    %v240 = vand.u32 2147483647, %v230
    %vm241 = vcmp.eq.f32.partialorder %v240, 8.507059e+37
    %v242 = vand.u32 %v230, 2147483648
    %v243 = vor.u32 1.1754944e-38, %v242
    %v244 = vsel %vm241, %v243, %v239
    %v245 = vmul.f32 1.0, %v244
    %247 = vrot.lane.b32.xlu0 %v224, 64
    %v248 = vpop.permute.xlu0 %247
    %v250 = vmul.f32 %v245, %v248
    %252 = vrot.lane.b32.xlu0 %v250, 64
    %v253 = vpop.permute.xlu0 %252
    %v255 = vadd.f32 %v199, %v253
    %v256 = vtanh.pop %v255
    %v257 = vsub.f32 0.0, %v256
    %259 = vrot.lane.b32.xlu0 %v257, 96
    %v260 = vpop.permute.xlu0 %259
    %v262 = vmul.f32 %v245, %v260
    %264 = vrot.lane.b32.xlu0 %v262, 32
    %v265 = vpop.permute.xlu0 %264
    %v267 = vadd.f32 %v256, %v265
    %v268 = vld [vmem:[%s178 + $0x38] sm:$0xff]
    %v270 = vperm.slane %v198, 0
    %272 = vmatpush.msra.mxu0 0.0
    %273 = vmatpush.msra.mxu0 0.0
    %274 = vmatpush.msra.mxu0 0.0
    %275 = vmatpush.msra.mxu0 0.0
    %276 = vmatpush.msra.mxu0 0.0
    %277 = vmatpush.msra.mxu0 0.0
    %278 = vmatpush.msra.mxu0 0.0
    %279 = vmatpush.msra.mxu0 0.0
    %280 = vmatpush.msra.mxu0 0.0
    %281 = vmatpush.msra.mxu0 0.0
    %282 = vmatpush.msra.mxu0 0.0
    %283 = vmatpush.msra.mxu0 0.0
    %284 = vmatpush.msra.mxu0 %v195
    %285 = vmatpush.msra.mxu0 %v194
    %286 = vmatpush.msra.mxu0 %v193
    %287 = vmatpush.msra.mxu0 %v192
    %288 = vmatmul.f32.gmra.mxu0 %v204
    %v289 = vpop.f32.mrf.mxu0
    %v290 = vadd.f32 %v270, %v289
    %291 = vdwg.mxu0
    %v292 = vadd.f32 %v268, %v290
    %v293 = vxor.u32 %v292, 2147483648
    %v294 = vmul.f32 %v293, 1.442695
    %v295 = vpow.pop %v294
    %v296 = vadd.f32 %v295, 1.0
    %v297 = vrcp.pop %v296
    %v298 = vmul.f32 %v296, %v297
    %v299 = vsub.f32 1.0, %v298
    %v300 = vmul.f32 %v297, %v299
    %v301 = vadd.f32 %v297, %v300
    %vm302 = vweird.f32 %v296
    %vm303 = vweird.f32 %v297
    %vm304 = vmor %vm302, %vm303
    %v305 = vsel %vm304, %v297, %v301
    %v306 = vand.u32 2147483647, %v296
    %vm307 = vcmp.eq.f32.partialorder %v306, 8.507059e+37
    %v308 = vand.u32 %v296, 2147483648
    %v309 = vor.u32 1.1754944e-38, %v308
    %v310 = vsel %vm307, %v309, %v305
    %v311 = vmul.f32 1.0, %v310
    %313 = vrot.lane.b32.xlu0 %v290, 64
    %v314 = vpop.permute.xlu0 %313
    %v316 = vmul.f32 %v311, %v314
    %318 = vrot.lane.b32.xlu0 %v316, 64
    %v319 = vpop.permute.xlu0 %318
    %v321 = vadd.f32 %v268, %v319
    %v322 = vtanh.pop %v321
    %v323 = vsub.f32 0.0, %v322
    %325 = vrot.lane.b32.xlu0 %v323, 96
    %v326 = vpop.permute.xlu0 %325
    %v328 = vmul.f32 %v311, %v326
    %330 = vrot.lane.b32.xlu0 %v328, 32
    %v331 = vpop.permute.xlu0 %330
    %v333 = vadd.f32 %v322, %v331
    %v334 = vld [vmem:[#allocation2 + $0x8] sm:$0xff]
    %336 = vrot.lane.b32.xlu0 %v267, 64
    %v337 = vpop.permute.xlu0 %336
    %v338 = vsel %vm52, %v337, 0
    %340 = vmatpush.msra.mxu0 0.0
    %341 = vmatpush.msra.mxu0 0.0
    %342 = vmatpush.msra.mxu0 0.0
    %343 = vmatpush.msra.mxu0 0.0
    %344 = vmatpush.msra.mxu0 0.0
    %345 = vmatpush.msra.mxu0 0.0
    %346 = vmatpush.msra.mxu0 0.0
    %347 = vmatpush.msra.mxu0 0.0
    %348 = vmatpush.msra.mxu0 0.0
    %349 = vmatpush.msra.mxu0 0.0
    %350 = vmatpush.msra.mxu0 0.0
    %351 = vmatpush.msra.mxu0 0.0
    %352 = vmatpush.msra.mxu0 %v190
    %353 = vmatpush.msra.mxu0 %v189
    %354 = vmatpush.msra.mxu0 %v188
    %355 = vmatpush.msra.mxu0 %v187
    %356 = vmatmul.f32.gmra.mxu0 %v338
    %v357 = vpop.f32.mrf.mxu0
    %v358 = vadd.f32 %v201, %v357
    %359 = vdwg.mxu0
    %v360 = vadd.f32 %v334, %v358
    %v361 = vxor.u32 %v360, 2147483648
    %v362 = vmul.f32 %v361, 1.442695
    %v363 = vpow.pop %v362
    %v364 = vadd.f32 %v363, 1.0
    %v365 = vrcp.pop %v364
    %v366 = vmul.f32 %v364, %v365
    %v367 = vsub.f32 1.0, %v366
    %v368 = vmul.f32 %v365, %v367
    %v369 = vadd.f32 %v365, %v368
    %vm370 = vweird.f32 %v364
    %vm371 = vweird.f32 %v365
    %vm372 = vmor %vm370, %vm371
    %v373 = vsel %vm372, %v365, %v369
    %v374 = vand.u32 2147483647, %v364
    %vm375 = vcmp.eq.f32.partialorder %v374, 8.507059e+37
    %v376 = vand.u32 %v364, 2147483648
    %v377 = vor.u32 1.1754944e-38, %v376
    %v378 = vsel %vm375, %v377, %v373
    %v379 = vmul.f32 1.0, %v378
    %381 = vrot.lane.b32.xlu0 %v358, 64
    %v382 = vpop.permute.xlu0 %381
    %v384 = vmul.f32 %v379, %v382
    %386 = vrot.lane.b32.xlu0 %v384, 64
    %v387 = vpop.permute.xlu0 %386
    %v389 = vadd.f32 %v334, %v387
    %v390 = vtanh.pop %v389
    %v391 = vsub.f32 %v267, %v390
    %393 = vrot.lane.b32.xlu0 %v391, 96
    %v394 = vpop.permute.xlu0 %393
    %v396 = vmul.f32 %v379, %v394
    %398 = vrot.lane.b32.xlu0 %v396, 32
    %v399 = vpop.permute.xlu0 %398
    %v401 = vadd.f32 %v390, %v399
    %v402 = vld [vmem:[%s178 + $0x30] sm:$0xff]
    %404 = vrot.lane.b32.xlu0 %v333, 64
    %v405 = vpop.permute.xlu0 %404
    %v406 = vsel %vm52, %v405, 0
    %408 = vmatpush.msra.mxu0 0.0
    %409 = vmatpush.msra.mxu0 0.0
    %410 = vmatpush.msra.mxu0 0.0
    %411 = vmatpush.msra.mxu0 0.0
    %412 = vmatpush.msra.mxu0 0.0
    %413 = vmatpush.msra.mxu0 0.0
    %414 = vmatpush.msra.mxu0 0.0
    %415 = vmatpush.msra.mxu0 0.0
    %416 = vmatpush.msra.mxu0 0.0
    %417 = vmatpush.msra.mxu0 0.0
    %418 = vmatpush.msra.mxu0 0.0
    %419 = vmatpush.msra.mxu0 0.0
    %420 = vmatpush.msra.mxu0 %v195
    %421 = vmatpush.msra.mxu0 %v194
    %422 = vmatpush.msra.mxu0 %v193
    %423 = vmatpush.msra.mxu0 %v192
    %424 = vmatmul.f32.gmra.mxu0 %v406
    %v425 = vpop.f32.mrf.mxu0
    %v426 = vadd.f32 %v270, %v425
    %427 = vdwg.mxu0
    %v428 = vadd.f32 %v402, %v426
    %v429 = vxor.u32 %v428, 2147483648
    %v430 = vmul.f32 %v429, 1.442695
    %v431 = vpow.pop %v430
    %v432 = vadd.f32 %v431, 1.0
    %v433 = vrcp.pop %v432
    %v434 = vmul.f32 %v432, %v433
    %v435 = vsub.f32 1.0, %v434
    %v436 = vmul.f32 %v433, %v435
    %v437 = vadd.f32 %v433, %v436
    %vm438 = vweird.f32 %v432
    %vm439 = vweird.f32 %v433
    %vm440 = vmor %vm438, %vm439
    %v441 = vsel %vm440, %v433, %v437
    %v442 = vand.u32 2147483647, %v432
    %vm443 = vcmp.eq.f32.partialorder %v442, 8.507059e+37
    %v444 = vand.u32 %v432, 2147483648
    %v445 = vor.u32 1.1754944e-38, %v444
    %v446 = vsel %vm443, %v445, %v441
    %v447 = vmul.f32 1.0, %v446
    %449 = vrot.lane.b32.xlu0 %v426, 64
    %v450 = vpop.permute.xlu0 %449
    %v452 = vmul.f32 %v447, %v450
    %454 = vrot.lane.b32.xlu0 %v452, 64
    %v455 = vpop.permute.xlu0 %454
    %v457 = vadd.f32 %v402, %v455
    %v458 = vtanh.pop %v457
    %v459 = vsub.f32 %v333, %v458
    %461 = vrot.lane.b32.xlu0 %v459, 96
    %v462 = vpop.permute.xlu0 %461
    %v464 = vmul.f32 %v447, %v462
    %466 = vrot.lane.b32.xlu0 %v464, 32
    %v467 = vpop.permute.xlu0 %466
    %v469 = vadd.f32 %v458, %v467
    %v470 = vld [vmem:[#allocation2 + $0x10] sm:$0xff]
    %472 = vrot.lane.b32.xlu0 %v401, 64
    %v473 = vpop.permute.xlu0 %472
    %v474 = vsel %vm52, %v473, 0
    %476 = vmatpush.msra.mxu0 0.0
    %477 = vmatpush.msra.mxu0 0.0
    %478 = vmatpush.msra.mxu0 0.0
    %479 = vmatpush.msra.mxu0 0.0
    %480 = vmatpush.msra.mxu0 0.0
    %481 = vmatpush.msra.mxu0 0.0
    %482 = vmatpush.msra.mxu0 0.0
    %483 = vmatpush.msra.mxu0 0.0
    %484 = vmatpush.msra.mxu0 0.0
    %485 = vmatpush.msra.mxu0 0.0
    %486 = vmatpush.msra.mxu0 0.0
    %487 = vmatpush.msra.mxu0 0.0
    %488 = vmatpush.msra.mxu0 %v190
    %489 = vmatpush.msra.mxu0 %v189
    %490 = vmatpush.msra.mxu0 %v188
    %491 = vmatpush.msra.mxu0 %v187
    %492 = vmatmul.f32.gmra.mxu0 %v474
    %v493 = vpop.f32.mrf.mxu0
    %v494 = vadd.f32 %v201, %v493
    %495 = vdwg.mxu0
    %v496 = vadd.f32 %v470, %v494
    %v497 = vxor.u32 %v496, 2147483648
    %v498 = vmul.f32 %v497, 1.442695
    %v499 = vpow.pop %v498
    %v500 = vadd.f32 %v499, 1.0
    %v501 = vrcp.pop %v500
    %v502 = vmul.f32 %v500, %v501
    %v503 = vsub.f32 1.0, %v502
    %v504 = vmul.f32 %v501, %v503
    %v505 = vadd.f32 %v501, %v504
    %vm506 = vweird.f32 %v500
    %vm507 = vweird.f32 %v501
    %vm508 = vmor %vm506, %vm507
    %v509 = vsel %vm508, %v501, %v505
    %v510 = vand.u32 2147483647, %v500
    %vm511 = vcmp.eq.f32.partialorder %v510, 8.507059e+37
    %v512 = vand.u32 %v500, 2147483648
    %v513 = vor.u32 1.1754944e-38, %v512
    %v514 = vsel %vm511, %v513, %v509
    %v515 = vmul.f32 1.0, %v514
    %517 = vrot.lane.b32.xlu0 %v494, 64
    %v518 = vpop.permute.xlu0 %517
    %v520 = vmul.f32 %v515, %v518
    %522 = vrot.lane.b32.xlu0 %v520, 64
    %v523 = vpop.permute.xlu0 %522
    %v525 = vadd.f32 %v470, %v523
    %v526 = vtanh.pop %v525
    %v527 = vsub.f32 %v401, %v526
    %529 = vrot.lane.b32.xlu0 %v527, 96
    %v530 = vpop.permute.xlu0 %529
    %v532 = vmul.f32 %v515, %v530
    %534 = vrot.lane.b32.xlu0 %v532, 32
    %v535 = vpop.permute.xlu0 %534
    %v537 = vadd.f32 %v526, %v535
    %v538 = vld [vmem:[%s178 + $0x28] sm:$0xff]
    %540 = vrot.lane.b32.xlu0 %v469, 64
    %v541 = vpop.permute.xlu0 %540
    %v542 = vsel %vm52, %v541, 0
    %544 = vmatpush.msra.mxu0 0.0
    %545 = vmatpush.msra.mxu0 0.0
    %546 = vmatpush.msra.mxu0 0.0
    %547 = vmatpush.msra.mxu0 0.0
    %548 = vmatpush.msra.mxu0 0.0
    %549 = vmatpush.msra.mxu0 0.0
    %550 = vmatpush.msra.mxu0 0.0
    %551 = vmatpush.msra.mxu0 0.0
    %552 = vmatpush.msra.mxu0 0.0
    %553 = vmatpush.msra.mxu0 0.0
    %554 = vmatpush.msra.mxu0 0.0
    %555 = vmatpush.msra.mxu0 0.0
    %556 = vmatpush.msra.mxu0 %v195
    %557 = vmatpush.msra.mxu0 %v194
    %558 = vmatpush.msra.mxu0 %v193
    %559 = vmatpush.msra.mxu0 %v192
    %560 = vmatmul.f32.gmra.mxu0 %v542
    %v561 = vpop.f32.mrf.mxu0
    %v562 = vadd.f32 %v270, %v561
    %563 = vdwg.mxu0
    %v564 = vadd.f32 %v538, %v562
    %v565 = vxor.u32 %v564, 2147483648
    %v566 = vmul.f32 %v565, 1.442695
    %v567 = vpow.pop %v566
    %v568 = vadd.f32 %v567, 1.0
    %v569 = vrcp.pop %v568
    %v570 = vmul.f32 %v568, %v569
    %v571 = vsub.f32 1.0, %v570
    %v572 = vmul.f32 %v569, %v571
    %v573 = vadd.f32 %v569, %v572
    %vm574 = vweird.f32 %v568
    %vm575 = vweird.f32 %v569
    %vm576 = vmor %vm574, %vm575
    %v577 = vsel %vm576, %v569, %v573
    %v578 = vand.u32 2147483647, %v568
    %vm579 = vcmp.eq.f32.partialorder %v578, 8.507059e+37
    %v580 = vand.u32 %v568, 2147483648
    %v581 = vor.u32 1.1754944e-38, %v580
    %v582 = vsel %vm579, %v581, %v577
    %v583 = vmul.f32 1.0, %v582
    %585 = vrot.lane.b32.xlu0 %v562, 64
    %v586 = vpop.permute.xlu0 %585
    %v588 = vmul.f32 %v583, %v586
    %590 = vrot.lane.b32.xlu0 %v588, 64
    %v591 = vpop.permute.xlu0 %590
    %v593 = vadd.f32 %v538, %v591
    %v594 = vtanh.pop %v593
    %v595 = vsub.f32 %v469, %v594
    %597 = vrot.lane.b32.xlu0 %v595, 96
    %v598 = vpop.permute.xlu0 %597
    %v600 = vmul.f32 %v583, %v598
    %602 = vrot.lane.b32.xlu0 %v600, 32
    %v603 = vpop.permute.xlu0 %602
    %v605 = vadd.f32 %v594, %v603
    %v606 = vld [vmem:[#allocation2 + $0x18] sm:$0xff]
    %608 = vrot.lane.b32.xlu0 %v537, 64
    %v609 = vpop.permute.xlu0 %608
    %v610 = vsel %vm52, %v609, 0
    %612 = vmatpush.msra.mxu0 0.0
    %613 = vmatpush.msra.mxu0 0.0
    %614 = vmatpush.msra.mxu0 0.0
    %615 = vmatpush.msra.mxu0 0.0
    %616 = vmatpush.msra.mxu0 0.0
    %617 = vmatpush.msra.mxu0 0.0
    %618 = vmatpush.msra.mxu0 0.0
    %619 = vmatpush.msra.mxu0 0.0
    %620 = vmatpush.msra.mxu0 0.0
    %621 = vmatpush.msra.mxu0 0.0
    %622 = vmatpush.msra.mxu0 0.0
    %623 = vmatpush.msra.mxu0 0.0
    %624 = vmatpush.msra.mxu0 %v190
    %625 = vmatpush.msra.mxu0 %v189
    %626 = vmatpush.msra.mxu0 %v188
    %627 = vmatpush.msra.mxu0 %v187
    %628 = vmatmul.f32.gmra.mxu0 %v610
    %v629 = vpop.f32.mrf.mxu0
    %v630 = vadd.f32 %v201, %v629
    %631 = vdwg.mxu0
    %v632 = vadd.f32 %v606, %v630
    %v633 = vxor.u32 %v632, 2147483648
    %v634 = vmul.f32 %v633, 1.442695
    %v635 = vpow.pop %v634
    %v636 = vadd.f32 %v635, 1.0
    %v637 = vrcp.pop %v636
    %v638 = vmul.f32 %v636, %v637
    %v639 = vsub.f32 1.0, %v638
    %v640 = vmul.f32 %v637, %v639
    %v641 = vadd.f32 %v637, %v640
    %vm642 = vweird.f32 %v636
    %vm643 = vweird.f32 %v637
    %vm644 = vmor %vm642, %vm643
    %v645 = vsel %vm644, %v637, %v641
    %v646 = vand.u32 2147483647, %v636
    %vm647 = vcmp.eq.f32.partialorder %v646, 8.507059e+37
    %v648 = vand.u32 %v636, 2147483648
    %v649 = vor.u32 1.1754944e-38, %v648
    %v650 = vsel %vm647, %v649, %v645
    %v651 = vmul.f32 1.0, %v650
    %653 = vrot.lane.b32.xlu0 %v630, 64
    %v654 = vpop.permute.xlu0 %653
    %v656 = vmul.f32 %v651, %v654
    %658 = vrot.lane.b32.xlu0 %v656, 64
    %v659 = vpop.permute.xlu0 %658
    %v661 = vadd.f32 %v606, %v659
    %v662 = vtanh.pop %v661
    %v663 = vsub.f32 %v537, %v662
    %665 = vrot.lane.b32.xlu0 %v663, 96
    %v666 = vpop.permute.xlu0 %665
    %v668 = vmul.f32 %v651, %v666
    %670 = vrot.lane.b32.xlu0 %v668, 32
    %v671 = vpop.permute.xlu0 %670
    %v673 = vadd.f32 %v662, %v671
    %v674 = vld [vmem:[%s178 + $0x20] sm:$0xff]
    %676 = vrot.lane.b32.xlu0 %v605, 64
    %v677 = vpop.permute.xlu0 %676
    %v678 = vsel %vm52, %v677, 0
    %680 = vmatpush.msra.mxu0 0.0
    %681 = vmatpush.msra.mxu0 0.0
    %682 = vmatpush.msra.mxu0 0.0
    %683 = vmatpush.msra.mxu0 0.0
    %684 = vmatpush.msra.mxu0 0.0
    %685 = vmatpush.msra.mxu0 0.0
    %686 = vmatpush.msra.mxu0 0.0
    %687 = vmatpush.msra.mxu0 0.0
    %688 = vmatpush.msra.mxu0 0.0
    %689 = vmatpush.msra.mxu0 0.0
    %690 = vmatpush.msra.mxu0 0.0
    %691 = vmatpush.msra.mxu0 0.0
    %692 = vmatpush.msra.mxu0 %v195
    %693 = vmatpush.msra.mxu0 %v194
    %694 = vmatpush.msra.mxu0 %v193
    %695 = vmatpush.msra.mxu0 %v192
    %696 = vmatmul.f32.gmra.mxu0 %v678
    %v697 = vpop.f32.mrf.mxu0
    %v698 = vadd.f32 %v270, %v697
    %699 = vdwg.mxu0
    %v700 = vadd.f32 %v674, %v698
    %v701 = vxor.u32 %v700, 2147483648
    %v702 = vmul.f32 %v701, 1.442695
    %v703 = vpow.pop %v702
    %v704 = vadd.f32 %v703, 1.0
    %v705 = vrcp.pop %v704
    %v706 = vmul.f32 %v704, %v705
    %v707 = vsub.f32 1.0, %v706
    %v708 = vmul.f32 %v705, %v707
    %v709 = vadd.f32 %v705, %v708
    %vm710 = vweird.f32 %v704
    %vm711 = vweird.f32 %v705
    %vm712 = vmor %vm710, %vm711
    %v713 = vsel %vm712, %v705, %v709
    %v714 = vand.u32 2147483647, %v704
    %vm715 = vcmp.eq.f32.partialorder %v714, 8.507059e+37
    %v716 = vand.u32 %v704, 2147483648
    %v717 = vor.u32 1.1754944e-38, %v716
    %v718 = vsel %vm715, %v717, %v713
    %v719 = vmul.f32 1.0, %v718
    %721 = vrot.lane.b32.xlu0 %v698, 64
    %v722 = vpop.permute.xlu0 %721
    %v724 = vmul.f32 %v719, %v722
    %726 = vrot.lane.b32.xlu0 %v724, 64
    %v727 = vpop.permute.xlu0 %726
    %v729 = vadd.f32 %v674, %v727
    %v730 = vtanh.pop %v729
    %v731 = vsub.f32 %v605, %v730
    %733 = vrot.lane.b32.xlu0 %v731, 96
    %v734 = vpop.permute.xlu0 %733
    %v736 = vmul.f32 %v719, %v734
    %738 = vrot.lane.b32.xlu0 %v736, 32
    %v739 = vpop.permute.xlu0 %738
    %v741 = vadd.f32 %v730, %v739
    %v742 = vld [vmem:[#allocation2 + $0x20] sm:$0xff]
    %744 = vrot.lane.b32.xlu0 %v673, 64
    %v745 = vpop.permute.xlu0 %744
    %v746 = vsel %vm52, %v745, 0
    %748 = vmatpush.msra.mxu0 0.0
    %749 = vmatpush.msra.mxu0 0.0
    %750 = vmatpush.msra.mxu0 0.0
    %751 = vmatpush.msra.mxu0 0.0
    %752 = vmatpush.msra.mxu0 0.0
    %753 = vmatpush.msra.mxu0 0.0
    %754 = vmatpush.msra.mxu0 0.0
    %755 = vmatpush.msra.mxu0 0.0
    %756 = vmatpush.msra.mxu0 0.0
    %757 = vmatpush.msra.mxu0 0.0
    %758 = vmatpush.msra.mxu0 0.0
    %759 = vmatpush.msra.mxu0 0.0
    %760 = vmatpush.msra.mxu0 %v190
    %761 = vmatpush.msra.mxu0 %v189
    %762 = vmatpush.msra.mxu0 %v188
    %763 = vmatpush.msra.mxu0 %v187
    %764 = vmatmul.f32.gmra.mxu0 %v746
    %v765 = vpop.f32.mrf.mxu0
    %v766 = vadd.f32 %v201, %v765
    %767 = vdwg.mxu0
    %v768 = vadd.f32 %v742, %v766
    %v769 = vxor.u32 %v768, 2147483648
    %v770 = vmul.f32 %v769, 1.442695
    %v771 = vpow.pop %v770
    %v772 = vadd.f32 %v771, 1.0
    %v773 = vrcp.pop %v772
    %v774 = vmul.f32 %v772, %v773
    %v775 = vsub.f32 1.0, %v774
    %v776 = vmul.f32 %v773, %v775
    %v777 = vadd.f32 %v773, %v776
    %vm778 = vweird.f32 %v772
    %vm779 = vweird.f32 %v773
    %vm780 = vmor %vm778, %vm779
    %v781 = vsel %vm780, %v773, %v777
    %v782 = vand.u32 2147483647, %v772
    %vm783 = vcmp.eq.f32.partialorder %v782, 8.507059e+37
    %v784 = vand.u32 %v772, 2147483648
    %v785 = vor.u32 1.1754944e-38, %v784
    %v786 = vsel %vm783, %v785, %v781
    %v787 = vmul.f32 1.0, %v786
    %789 = vrot.lane.b32.xlu0 %v766, 64
    %v790 = vpop.permute.xlu0 %789
    %v792 = vmul.f32 %v787, %v790
    %794 = vrot.lane.b32.xlu0 %v792, 64
    %v795 = vpop.permute.xlu0 %794
    %v797 = vadd.f32 %v742, %v795
    %v798 = vtanh.pop %v797
    %v799 = vsub.f32 %v673, %v798
    %801 = vrot.lane.b32.xlu0 %v799, 96
    %v802 = vpop.permute.xlu0 %801
    %v804 = vmul.f32 %v787, %v802
    %806 = vrot.lane.b32.xlu0 %v804, 32
    %v807 = vpop.permute.xlu0 %806
    %v809 = vadd.f32 %v798, %v807
    %v810 = vld [vmem:[%s178 + $0x18] sm:$0xff]
    %812 = vrot.lane.b32.xlu0 %v741, 64
    %v813 = vpop.permute.xlu0 %812
    %v814 = vsel %vm52, %v813, 0
    %816 = vmatpush.msra.mxu0 0.0
    %817 = vmatpush.msra.mxu0 0.0
    %818 = vmatpush.msra.mxu0 0.0
    %819 = vmatpush.msra.mxu0 0.0
    %820 = vmatpush.msra.mxu0 0.0
    %821 = vmatpush.msra.mxu0 0.0
    %822 = vmatpush.msra.mxu0 0.0
    %823 = vmatpush.msra.mxu0 0.0
    %824 = vmatpush.msra.mxu0 0.0
    %825 = vmatpush.msra.mxu0 0.0
    %826 = vmatpush.msra.mxu0 0.0
    %827 = vmatpush.msra.mxu0 0.0
    %828 = vmatpush.msra.mxu0 %v195
    %829 = vmatpush.msra.mxu0 %v194
    %830 = vmatpush.msra.mxu0 %v193
    %831 = vmatpush.msra.mxu0 %v192
    %832 = vmatmul.f32.gmra.mxu0 %v814
    %v833 = vpop.f32.mrf.mxu0
    %v834 = vadd.f32 %v270, %v833
    %835 = vdwg.mxu0
    %v836 = vadd.f32 %v810, %v834
    %v837 = vxor.u32 %v836, 2147483648
    %v838 = vmul.f32 %v837, 1.442695
    %v839 = vpow.pop %v838
    %v840 = vadd.f32 %v839, 1.0
    %v841 = vrcp.pop %v840
    %v842 = vmul.f32 %v840, %v841
    %v843 = vsub.f32 1.0, %v842
    %v844 = vmul.f32 %v841, %v843
    %v845 = vadd.f32 %v841, %v844
    %vm846 = vweird.f32 %v840
    %vm847 = vweird.f32 %v841
    %vm848 = vmor %vm846, %vm847
    %v849 = vsel %vm848, %v841, %v845
    %v850 = vand.u32 2147483647, %v840
    %vm851 = vcmp.eq.f32.partialorder %v850, 8.507059e+37
    %v852 = vand.u32 %v840, 2147483648
    %v853 = vor.u32 1.1754944e-38, %v852
    %v854 = vsel %vm851, %v853, %v849
    %v855 = vmul.f32 1.0, %v854
    %857 = vrot.lane.b32.xlu0 %v834, 64
    %v858 = vpop.permute.xlu0 %857
    %v860 = vmul.f32 %v855, %v858
    %862 = vrot.lane.b32.xlu0 %v860, 64
    %v863 = vpop.permute.xlu0 %862
    %v865 = vadd.f32 %v810, %v863
    %v866 = vtanh.pop %v865
    %v867 = vsub.f32 %v741, %v866
    %869 = vrot.lane.b32.xlu0 %v867, 96
    %v870 = vpop.permute.xlu0 %869
    %v872 = vmul.f32 %v855, %v870
    %874 = vrot.lane.b32.xlu0 %v872, 32
    %v875 = vpop.permute.xlu0 %874
    %v877 = vadd.f32 %v866, %v875
    %v878 = vld [vmem:[#allocation2 + $0x28] sm:$0xff]
    %880 = vrot.lane.b32.xlu0 %v809, 64
    %v881 = vpop.permute.xlu0 %880
    %v882 = vsel %vm52, %v881, 0
    %884 = vmatpush.msra.mxu0 0.0
    %885 = vmatpush.msra.mxu0 0.0
    %886 = vmatpush.msra.mxu0 0.0
    %887 = vmatpush.msra.mxu0 0.0
    %888 = vmatpush.msra.mxu0 0.0
    %889 = vmatpush.msra.mxu0 0.0
    %890 = vmatpush.msra.mxu0 0.0
    %891 = vmatpush.msra.mxu0 0.0
    %892 = vmatpush.msra.mxu0 0.0
    %893 = vmatpush.msra.mxu0 0.0
    %894 = vmatpush.msra.mxu0 0.0
    %895 = vmatpush.msra.mxu0 0.0
    %896 = vmatpush.msra.mxu0 %v190
    %897 = vmatpush.msra.mxu0 %v189
    %898 = vmatpush.msra.mxu0 %v188
    %899 = vmatpush.msra.mxu0 %v187
    %900 = vmatmul.f32.gmra.mxu0 %v882
    %v901 = vpop.f32.mrf.mxu0
    %v902 = vadd.f32 %v201, %v901
    %903 = vdwg.mxu0
    %v904 = vadd.f32 %v878, %v902
    %v905 = vxor.u32 %v904, 2147483648
    %v906 = vmul.f32 %v905, 1.442695
    %v907 = vpow.pop %v906
    %v908 = vadd.f32 %v907, 1.0
    %v909 = vrcp.pop %v908
    %v910 = vmul.f32 %v908, %v909
    %v911 = vsub.f32 1.0, %v910
    %v912 = vmul.f32 %v909, %v911
    %v913 = vadd.f32 %v909, %v912
    %vm914 = vweird.f32 %v908
    %vm915 = vweird.f32 %v909
    %vm916 = vmor %vm914, %vm915
    %v917 = vsel %vm916, %v909, %v913
    %v918 = vand.u32 2147483647, %v908
    %vm919 = vcmp.eq.f32.partialorder %v918, 8.507059e+37
    %v920 = vand.u32 %v908, 2147483648
    %v921 = vor.u32 1.1754944e-38, %v920
    %v922 = vsel %vm919, %v921, %v917
    %v923 = vmul.f32 1.0, %v922
    %925 = vrot.lane.b32.xlu0 %v902, 64
    %v926 = vpop.permute.xlu0 %925
    %v928 = vmul.f32 %v923, %v926
    %930 = vrot.lane.b32.xlu0 %v928, 64
    %v931 = vpop.permute.xlu0 %930
    %v933 = vadd.f32 %v878, %v931
    %v934 = vtanh.pop %v933
    %v935 = vsub.f32 %v809, %v934
    %937 = vrot.lane.b32.xlu0 %v935, 96
    %v938 = vpop.permute.xlu0 %937
    %v940 = vmul.f32 %v923, %v938
    %942 = vrot.lane.b32.xlu0 %v940, 32
    %v943 = vpop.permute.xlu0 %942
    %v945 = vadd.f32 %v934, %v943
    %v946 = vld [vmem:[%s178 + $0x10] sm:$0xff]
    %948 = vrot.lane.b32.xlu0 %v877, 64
    %v949 = vpop.permute.xlu0 %948
    %v950 = vsel %vm52, %v949, 0
    %952 = vmatpush.msra.mxu0 0.0
    %953 = vmatpush.msra.mxu0 0.0
    %954 = vmatpush.msra.mxu0 0.0
    %955 = vmatpush.msra.mxu0 0.0
    %956 = vmatpush.msra.mxu0 0.0
    %957 = vmatpush.msra.mxu0 0.0
    %958 = vmatpush.msra.mxu0 0.0
    %959 = vmatpush.msra.mxu0 0.0
    %960 = vmatpush.msra.mxu0 0.0
    %961 = vmatpush.msra.mxu0 0.0
    %962 = vmatpush.msra.mxu0 0.0
    %963 = vmatpush.msra.mxu0 0.0
    %964 = vmatpush.msra.mxu0 %v195
    %965 = vmatpush.msra.mxu0 %v194
    %966 = vmatpush.msra.mxu0 %v193
    %967 = vmatpush.msra.mxu0 %v192
    %968 = vmatmul.f32.gmra.mxu0 %v950
    %v969 = vpop.f32.mrf.mxu0
    %v970 = vadd.f32 %v270, %v969
    %971 = vdwg.mxu0
    %v972 = vadd.f32 %v946, %v970
    %v973 = vxor.u32 %v972, 2147483648
    %v974 = vmul.f32 %v973, 1.442695
    %v975 = vpow.pop %v974
    %v976 = vadd.f32 %v975, 1.0
    %v977 = vrcp.pop %v976
    %v978 = vmul.f32 %v976, %v977
    %v979 = vsub.f32 1.0, %v978
    %v980 = vmul.f32 %v977, %v979
    %v981 = vadd.f32 %v977, %v980
    %vm982 = vweird.f32 %v976
    %vm983 = vweird.f32 %v977
    %vm984 = vmor %vm982, %vm983
    %v985 = vsel %vm984, %v977, %v981
    %v986 = vand.u32 2147483647, %v976
    %vm987 = vcmp.eq.f32.partialorder %v986, 8.507059e+37
    %v988 = vand.u32 %v976, 2147483648
    %v989 = vor.u32 1.1754944e-38, %v988
    %v990 = vsel %vm987, %v989, %v985
    %v991 = vmul.f32 1.0, %v990
    %993 = vrot.lane.b32.xlu0 %v970, 64
    %v994 = vpop.permute.xlu0 %993
    %v996 = vmul.f32 %v991, %v994
    %998 = vrot.lane.b32.xlu0 %v996, 64
    %v999 = vpop.permute.xlu0 %998
    %v1001 = vadd.f32 %v946, %v999
    %v1002 = vtanh.pop %v1001
    %v1003 = vsub.f32 %v877, %v1002
    %1005 = vrot.lane.b32.xlu0 %v1003, 96
    %v1006 = vpop.permute.xlu0 %1005
    %v1008 = vmul.f32 %v991, %v1006
    %1010 = vrot.lane.b32.xlu0 %v1008, 32
    %v1011 = vpop.permute.xlu0 %1010
    %v1013 = vadd.f32 %v1002, %v1011
    %v1014 = vld [vmem:[#allocation2 + $0x30] sm:$0xff]
    %1016 = vrot.lane.b32.xlu0 %v945, 64
    %v1017 = vpop.permute.xlu0 %1016
    %v1018 = vsel %vm52, %v1017, 0
    %1020 = vmatpush.msra.mxu0 0.0
    %1021 = vmatpush.msra.mxu0 0.0
    %1022 = vmatpush.msra.mxu0 0.0
    %1023 = vmatpush.msra.mxu0 0.0
    %1024 = vmatpush.msra.mxu0 0.0
    %1025 = vmatpush.msra.mxu0 0.0
    %1026 = vmatpush.msra.mxu0 0.0
    %1027 = vmatpush.msra.mxu0 0.0
    %1028 = vmatpush.msra.mxu0 0.0
    %1029 = vmatpush.msra.mxu0 0.0
    %1030 = vmatpush.msra.mxu0 0.0
    %1031 = vmatpush.msra.mxu0 0.0
    %1032 = vmatpush.msra.mxu0 %v190
    %1033 = vmatpush.msra.mxu0 %v189
    %1034 = vmatpush.msra.mxu0 %v188
    %1035 = vmatpush.msra.mxu0 %v187
    %1036 = vmatmul.f32.gmra.mxu0 %v1018
    %v1037 = vpop.f32.mrf.mxu0
    %v1038 = vadd.f32 %v201, %v1037
    %1039 = vdwg.mxu0
    %v1040 = vadd.f32 %v1014, %v1038
    %v1041 = vxor.u32 %v1040, 2147483648
    %v1042 = vmul.f32 %v1041, 1.442695
    %v1043 = vpow.pop %v1042
    %v1044 = vadd.f32 %v1043, 1.0
    %v1045 = vrcp.pop %v1044
    %v1046 = vmul.f32 %v1044, %v1045
    %v1047 = vsub.f32 1.0, %v1046
    %v1048 = vmul.f32 %v1045, %v1047
    %v1049 = vadd.f32 %v1045, %v1048
    %vm1050 = vweird.f32 %v1044
    %vm1051 = vweird.f32 %v1045
    %vm1052 = vmor %vm1050, %vm1051
    %v1053 = vsel %vm1052, %v1045, %v1049
    %v1054 = vand.u32 2147483647, %v1044
    %vm1055 = vcmp.eq.f32.partialorder %v1054, 8.507059e+37
    %v1056 = vand.u32 %v1044, 2147483648
    %v1057 = vor.u32 1.1754944e-38, %v1056
    %v1058 = vsel %vm1055, %v1057, %v1053
    %v1059 = vmul.f32 1.0, %v1058
    %1061 = vrot.lane.b32.xlu0 %v1038, 64
    %v1062 = vpop.permute.xlu0 %1061
    %v1064 = vmul.f32 %v1059, %v1062
    %1066 = vrot.lane.b32.xlu0 %v1064, 64
    %v1067 = vpop.permute.xlu0 %1066
    %v1069 = vadd.f32 %v1014, %v1067
    %v1070 = vtanh.pop %v1069
    %v1071 = vsub.f32 %v945, %v1070
    %1073 = vrot.lane.b32.xlu0 %v1071, 96
    %v1074 = vpop.permute.xlu0 %1073
    %v1076 = vmul.f32 %v1059, %v1074
    %1078 = vrot.lane.b32.xlu0 %v1076, 32
    %v1079 = vpop.permute.xlu0 %1078
    %v1081 = vadd.f32 %v1070, %v1079
    %v1082 = vld [vmem:[%s178 + $0x8] sm:$0xff]
    %1084 = vrot.lane.b32.xlu0 %v1013, 64
    %v1085 = vpop.permute.xlu0 %1084
    %v1086 = vsel %vm52, %v1085, 0
    %1088 = vmatpush.msra.mxu0 0.0
    %1089 = vmatpush.msra.mxu0 0.0
    %1090 = vmatpush.msra.mxu0 0.0
    %1091 = vmatpush.msra.mxu0 0.0
    %1092 = vmatpush.msra.mxu0 0.0
    %1093 = vmatpush.msra.mxu0 0.0
    %1094 = vmatpush.msra.mxu0 0.0
    %1095 = vmatpush.msra.mxu0 0.0
    %1096 = vmatpush.msra.mxu0 0.0
    %1097 = vmatpush.msra.mxu0 0.0
    %1098 = vmatpush.msra.mxu0 0.0
    %1099 = vmatpush.msra.mxu0 0.0
    %1100 = vmatpush.msra.mxu0 %v195
    %1101 = vmatpush.msra.mxu0 %v194
    %1102 = vmatpush.msra.mxu0 %v193
    %1103 = vmatpush.msra.mxu0 %v192
    %1104 = vmatmul.f32.gmra.mxu0 %v1086
    %v1105 = vpop.f32.mrf.mxu0
    %v1106 = vadd.f32 %v270, %v1105
    %1107 = vdwg.mxu0
    %v1108 = vadd.f32 %v1082, %v1106
    %v1109 = vxor.u32 %v1108, 2147483648
    %v1110 = vmul.f32 %v1109, 1.442695
    %v1111 = vpow.pop %v1110
    %v1112 = vadd.f32 %v1111, 1.0
    %v1113 = vrcp.pop %v1112
    %v1114 = vmul.f32 %v1112, %v1113
    %v1115 = vsub.f32 1.0, %v1114
    %v1116 = vmul.f32 %v1113, %v1115
    %v1117 = vadd.f32 %v1113, %v1116
    %vm1118 = vweird.f32 %v1112
    %vm1119 = vweird.f32 %v1113
    %vm1120 = vmor %vm1118, %vm1119
    %v1121 = vsel %vm1120, %v1113, %v1117
    %v1122 = vand.u32 2147483647, %v1112
    %vm1123 = vcmp.eq.f32.partialorder %v1122, 8.507059e+37
    %v1124 = vand.u32 %v1112, 2147483648
    %v1125 = vor.u32 1.1754944e-38, %v1124
    %v1126 = vsel %vm1123, %v1125, %v1121
    %v1127 = vmul.f32 1.0, %v1126
    %1129 = vrot.lane.b32.xlu0 %v1106, 64
    %v1130 = vpop.permute.xlu0 %1129
    %v1132 = vmul.f32 %v1127, %v1130
    %1134 = vrot.lane.b32.xlu0 %v1132, 64
    %v1135 = vpop.permute.xlu0 %1134
    %v1137 = vadd.f32 %v1082, %v1135
    %v1138 = vtanh.pop %v1137
    %v1139 = vsub.f32 %v1013, %v1138
    %1141 = vrot.lane.b32.xlu0 %v1139, 96
    %v1142 = vpop.permute.xlu0 %1141
    %v1144 = vmul.f32 %v1127, %v1142
    %1146 = vrot.lane.b32.xlu0 %v1144, 32
    %v1147 = vpop.permute.xlu0 %1146
    %v1149 = vadd.f32 %v1138, %v1147
    %v1150 = vld [vmem:[#allocation2 + $0x38] sm:$0xff]
    %1152 = vrot.lane.b32.xlu0 %v1081, 64
    %v1153 = vpop.permute.xlu0 %1152
    %v1154 = vsel %vm52, %v1153, 0
    %1156 = vmatpush.msra.mxu0 0.0
    %1157 = vmatpush.msra.mxu0 0.0
    %1158 = vmatpush.msra.mxu0 0.0
    %1159 = vmatpush.msra.mxu0 0.0
    %1160 = vmatpush.msra.mxu0 0.0
    %1161 = vmatpush.msra.mxu0 0.0
    %1162 = vmatpush.msra.mxu0 0.0
    %1163 = vmatpush.msra.mxu0 0.0
    %1164 = vmatpush.msra.mxu0 0.0
    %1165 = vmatpush.msra.mxu0 0.0
    %1166 = vmatpush.msra.mxu0 0.0
    %1167 = vmatpush.msra.mxu0 0.0
    %1168 = vmatpush.msra.mxu0 %v190
    %1169 = vmatpush.msra.mxu0 %v189
    %1170 = vmatpush.msra.mxu0 %v188
    %1171 = vmatpush.msra.mxu0 %v187
    %1172 = vmatmul.f32.gmra.mxu0 %v1154
    %v1173 = vpop.f32.mrf.mxu0
    %v1174 = vadd.f32 %v201, %v1173
    %1175 = vdwg.mxu0
    %v1176 = vadd.f32 %v1150, %v1174
    %v1177 = vxor.u32 %v1176, 2147483648
    %v1178 = vmul.f32 %v1177, 1.442695
    %v1179 = vpow.pop %v1178
    %v1180 = vadd.f32 %v1179, 1.0
    %v1181 = vrcp.pop %v1180
    %v1182 = vmul.f32 %v1180, %v1181
    %v1183 = vsub.f32 1.0, %v1182
    %v1184 = vmul.f32 %v1181, %v1183
    %v1185 = vadd.f32 %v1181, %v1184
    %vm1186 = vweird.f32 %v1180
    %vm1187 = vweird.f32 %v1181
    %vm1188 = vmor %vm1186, %vm1187
    %v1189 = vsel %vm1188, %v1181, %v1185
    %v1190 = vand.u32 2147483647, %v1180
    %vm1191 = vcmp.eq.f32.partialorder %v1190, 8.507059e+37
    %v1192 = vand.u32 %v1180, 2147483648
    %v1193 = vor.u32 1.1754944e-38, %v1192
    %v1194 = vsel %vm1191, %v1193, %v1189
    %v1195 = vmul.f32 1.0, %v1194
    %1197 = vrot.lane.b32.xlu0 %v1174, 64
    %v1198 = vpop.permute.xlu0 %1197
    %v1200 = vmul.f32 %v1195, %v1198
    %1202 = vrot.lane.b32.xlu0 %v1200, 64
    %v1203 = vpop.permute.xlu0 %1202
    %v1205 = vadd.f32 %v1150, %v1203
    %v1206 = vtanh.pop %v1205
    %v1207 = vsub.f32 %v1081, %v1206
    %1209 = vrot.lane.b32.xlu0 %v1207, 96
    %v1210 = vpop.permute.xlu0 %1209
    %v1212 = vmul.f32 %v1195, %v1210
    %1214 = vrot.lane.b32.xlu0 %v1212, 32
    %v1215 = vpop.permute.xlu0 %1214
    %v1217 = vadd.f32 %v1206, %v1215
    %v1218 = vld [vmem:[%s178] sm:$0xff]
    %1220 = vrot.lane.b32.xlu0 %v1149, 64
    %v1221 = vpop.permute.xlu0 %1220
    %v1222 = vsel %vm52, %v1221, 0
    %1224 = vmatpush.msra.mxu0 0.0
    %1225 = vmatpush.msra.mxu0 0.0
    %1226 = vmatpush.msra.mxu0 0.0
    %1227 = vmatpush.msra.mxu0 0.0
    %1228 = vmatpush.msra.mxu0 0.0
    %1229 = vmatpush.msra.mxu0 0.0
    %1230 = vmatpush.msra.mxu0 0.0
    %1231 = vmatpush.msra.mxu0 0.0
    %1232 = vmatpush.msra.mxu0 0.0
    %1233 = vmatpush.msra.mxu0 0.0
    %1234 = vmatpush.msra.mxu0 0.0
    %1235 = vmatpush.msra.mxu0 0.0
    %1236 = vmatpush.msra.mxu0 %v195
    %1237 = vmatpush.msra.mxu0 %v194
    %1238 = vmatpush.msra.mxu0 %v193
    %1239 = vmatpush.msra.mxu0 %v192
    %1240 = vmatmul.f32.gmra.mxu0 %v1222
    %v1241 = vpop.f32.mrf.mxu0
    %v1242 = vadd.f32 %v270, %v1241
    %1243 = vdwg.mxu0
    %v1244 = vadd.f32 %v1218, %v1242
    %v1245 = vxor.u32 %v1244, 2147483648
    %v1246 = vmul.f32 %v1245, 1.442695
    %v1247 = vpow.pop %v1246
    %v1248 = vadd.f32 %v1247, 1.0
    %v1249 = vrcp.pop %v1248
    %v1250 = vmul.f32 %v1248, %v1249
    %v1251 = vsub.f32 1.0, %v1250
    %v1252 = vmul.f32 %v1249, %v1251
    %v1253 = vadd.f32 %v1249, %v1252
    %vm1254 = vweird.f32 %v1248
    %vm1255 = vweird.f32 %v1249
    %vm1256 = vmor %vm1254, %vm1255
    %v1257 = vsel %vm1256, %v1249, %v1253
    %v1258 = vand.u32 2147483647, %v1248
    %vm1259 = vcmp.eq.f32.partialorder %v1258, 8.507059e+37
    %v1260 = vand.u32 %v1248, 2147483648
    %v1261 = vor.u32 1.1754944e-38, %v1260
    %v1262 = vsel %vm1259, %v1261, %v1257
    %v1263 = vmul.f32 1.0, %v1262
    %1265 = vrot.lane.b32.xlu0 %v1242, 64
    %v1266 = vpop.permute.xlu0 %1265
    %v1268 = vmul.f32 %v1263, %v1266
    %1270 = vrot.lane.b32.xlu0 %v1268, 64
    %v1271 = vpop.permute.xlu0 %1270
    %v1273 = vadd.f32 %v1218, %v1271
    %v1274 = vtanh.pop %v1273
    %v1275 = vsub.f32 %v1149, %v1274
    %1277 = vrot.lane.b32.xlu0 %v1275, 96
    %v1278 = vpop.permute.xlu0 %1277
    %v1280 = vmul.f32 %v1263, %v1278
    %1282 = vrot.lane.b32.xlu0 %v1280, 32
    %v1283 = vpop.permute.xlu0 %1282
    %v1285 = vadd.f32 %v1274, %v1283
    %1287 = vrot.lane.b32.xlu0 %v1217, 64
    %v1288 = vpop.permute.xlu0 %1287
    %vm1290 = vcmask 257027
    %1291 = vst.msk [vmem:[%s5 - $0x3] sm:$0x8] %vm1290, %v1288
    %1293 = vrot.lane.b32.xlu0 %v1285, 64
    %v1294 = vpop.permute.xlu0 %1293
    %1296 = vst.msk [vmem:[%s5 - $0x2] sm:$0x8] %vm1290, %v1294
    // Predicated region
    $region26: #{bigru_forward.1} parent=1 // pred_check
      _
    $region27: #{bigru_forward.1} parent=1 // pred_check_branch
      %1298 = sbr.rel (0) target = $region29
    $region28: #{bigru_forward.1} parent=1 // pred_region
      _
    $region29: #{bigru_forward.1} parent=1 // pred_fallthru
      _
    // Predicated region
    $region30: #{bigru_forward.1} parent=1 // pred_check
      _
    $region31: #{bigru_forward.1} parent=1 // pred_check_branch
      %1300 = sbr.rel (0) target = $region33
    $region32: #{bigru_forward.1} parent=1 // pred_region
      _
    $region33: #{bigru_forward.1} parent=1 // pred_fallthru
      _
    %1301 = vsyncpa [#allocation4], 1

</llo_original>
